<compile_context>
chip_gen: v6e
topology: v6e:2x2x1
jax: 0.10.0
libtpu: 0.0.40
codegen_flags: <defaults>
</compile_context>

<pallas_src>
import math

import numpy as np
import jax
import jax.numpy as jnp
from jax.experimental import pallas as pl
from jax.experimental.pallas import tpu as pltpu

LN_EPS = 1e-5  # torch.nn.LayerNorm default eps


def _mvke_kernel(x_ref, wv_ref, bv_ref, wk_ref, bk_ref, sel_ref, til_ref,
                 gamma_ref, beta_ref, o_ref):
    # Per-grid-step block shapes:
    #   x_ref:     (TB, F, E)   batch tile of shared field embeddings
    #   wv_ref:    (E, E)       Wv^T
    #   bv_ref:    (1, E)       bv
    #   wk_ref:    (E, V)       Wk^T q^T / sqrt(E)   (Q projection folded in)
    #   bk_ref:    (1, V)       bk  q^T / sqrt(E)
    #   sel_ref:   (V, V*E)     block-one-hot expansion matrix
    #   til_ref:   (E, V*E)     [ I_E | I_E | ... ]  (V copies)
    #   gamma_ref: (1, V*E)     LayerNorm gamma tiled V times along lanes
    #   beta_ref:  (1, V*E)     LayerNorm beta  tiled V times along lanes
    #   o_ref:     (TB, F, V*E) lane-dense output tile
    TB, F, E = x_ref.shape
    V = sel_ref.shape[0]
    R = TB * F

    x = x_ref[...].reshape(R, E)                                       # (R, E)

    # Two MXU pushes (value proj + folded, pre-scaled scores).  Keeping them
    # separate avoids slicing one fused result at a non-128-lane boundary.
    v = jnp.dot(x, wv_ref[...], preferred_element_type=jnp.float32) + bv_ref[...]
    scores = jnp.dot(x, wk_ref[...], preferred_element_type=jnp.float32) + bk_ref[...]

    # Softmax over the FEATURE axis within each batch row (== torch dim=1).
    s3 = scores.reshape(TB, F, V)
    m = jnp.max(s3, axis=1, keepdims=True)
    e = jnp.exp(s3 - m)
    denom = jnp.sum(e, axis=1, keepdims=True)
    # EUP reciprocal (co-issues for free) + one Newton step -> full f32 accuracy.
    inv = pl.reciprocal(denom, approx=True)
    inv = inv * (2.0 - denom * inv)
    attn = (e * inv).reshape(R, V)                                     # (R, V)

    # LayerNorm(attn_j * v + x) via linearity of the statistics:
    #   y_j - mean_j = attn_j*(v - mv) + (x - mx)
    #   var_j        = attn_j^2*var_v + 2*attn_j*cov + var_x
    inv_e = 1.0 / float(E)
    mv = jnp.sum(v, axis=-1, keepdims=True) * inv_e                    # (R, 1)
    mx = jnp.sum(x, axis=-1, keepdims=True) * inv_e
    cv = v - mv                                                        # centered value
    cx = x - mx                                                        # centered residual
    var_v = jnp.sum(cv * cv, axis=-1, keepdims=True) * inv_e
    cov = jnp.sum(cv * cx, axis=-1, keepdims=True) * inv_e
    var_x = jnp.sum(cx * cx, axis=-1, keepdims=True) * inv_e

    var = (attn * attn) * var_v + (2.0 * attn) * cov + var_x           # (R, V)
    var = jnp.maximum(var, 0.0)               # guard f32 cancellation (true var ~ 0)
    rstd = jax.lax.rsqrt(var + LN_EPS)                                 # (R, V)

    # Expand per-(row, vk) scalars across their E-lane chunk and replicate the
    # E-wide tensors V times — all on the (otherwise idle) MXU instead of XLU
    # lane shuffles / relayouts on the elementwise critical path.
    sel = sel_ref[...]                                                 # (V, V*E)
    til = til_ref[...]                                                 # (E, V*E)
    a_full = jnp.dot(attn, sel, preferred_element_type=jnp.float32)    # (R, V*E)
    s_full = jnp.dot(rstd, sel, preferred_element_type=jnp.float32)    # (R, V*E)
    cv_full = jnp.dot(cv, til, preferred_element_type=jnp.float32)     # (R, V*E)
    cx_full = jnp.dot(cx, til, preferred_element_type=jnp.float32)     # (R, V*E)

    y = (a_full * cv_full + cx_full) * s_full                          # normalized
    out = y * gamma_ref[...] + beta_ref[...]                           # (R, V*E)
    o_ref[...] = out.reshape(TB, F, V * E).astype(o_ref.dtype)


def _tensorcores_per_chip():
    """Best-effort: 2 TensorCores/chip on v7x, 1 on v5e/v6e."""
    try:
        kind = jax.devices()[0].device_kind.lower()
    except Exception:
        return 1
    return 2 if "v7" in kind else 1


def mvke_bottom_layer(vk_emb, shared_field_embs, params, *, block_b=None, out_dtype=None):
    B, F, E = shared_field_embs.shape
    V = vk_emb.shape[0]
    # TODO(synk): at production batch sizes consider out_dtype=jnp.bfloat16 to
    # halve the dominant (B,F,V*E) HBM write traffic (f32 stats kept in-kernel).
    dtype = out_dtype if out_dtype is not None else shared_field_embs.dtype

    # --- batch-invariant prep, done once in plain JAX ------------------------
    inv_sqrt_e = 1.0 / math.sqrt(float(E))
    q = vk_emb @ params["wq"].T + params["bq"]                         # (V, E)
    wk_q = (params["wk"].T @ q.T) * inv_sqrt_e                         # (E, V)
    bk_q = ((params["bk"] @ q.T) * inv_sqrt_e).reshape(1, V)           # (1, V)
    wv_t = params["wv"].T                                              # (E, E)
    bv = params["bv"].reshape(1, E)

    gamma_full = jnp.tile(params["gamma"], V).reshape(1, V * E)
    beta_full = jnp.tile(params["beta"], V).reshape(1, V * E)
    sel = jnp.repeat(jnp.eye(V, dtype=jnp.float32), E, axis=1)         # (V, V*E)
    til = jnp.tile(jnp.eye(E, dtype=jnp.float32), (1, V))              # (E, V*E)

    # --- batch tiling ---------------------------------------------------------
    per_row_tile_bytes = F * (E + V * E) * 4          # x row + out row, one buffer
    if block_b is None:
        target_b = max(1, -(-256 // F))               # >= 256 MXU rows per grid step
        vmem_budget = 24 << 20                        # conservative vs v7x's 64 MiB VMEM
        vmem_cap = max(1, vmem_budget // (2 * per_row_tile_bytes))
        block_b = min(B, max(target_b, 1), vmem_cap)
        # v7x megacore: keep >= 2 "parallel" steps, but only when each step
        # still fills the MXU (>= 256 rows).  On 1-TC chips use one big step.
        if _tensorcores_per_chip() >= 2 and B * F >= 512:
            block_b = min(block_b, -(-B // 2))
    block_b = max(1, min(block_b, B))
    # Ragged last block when B % block_b != 0: Pallas clips OOB reads/writes;
    # batch rows are independent, so no pad and no output slice is needed.
    grid_b = -(-B // block_b)

    rep_bytes = 4 * (E * E + E + E * V + V + V * V * E + E * V * E + 2 * V * E)
    needed = 2 * (block_b * per_row_tile_bytes) + 2 * rep_bytes        # double-buffered
    vmem_limit = int(min(56 << 20, max(16 << 20, 2 * needed)))

    def rep2(shape):
        # batch-invariant (replicated) 2-D operand
        return pl.BlockSpec(shape, lambda b: (0, 0))

    out = pl.pallas_call(
        _mvke_kernel,
        out_shape=jax.ShapeDtypeStruct((B, F, V * E), dtype),
        grid_spec=pltpu.PrefetchScalarGridSpec(
            num_scalar_prefetch=0,
            grid=(grid_b,),
            in_specs=[
                pl.BlockSpec((block_b, F, E), lambda b: (b, 0, 0)),    # x tile
                rep2((E, E)),                                          # Wv^T
                rep2((1, E)),                                          # bv
                rep2((E, V)),                                          # Wk^T q^T / sqrt(E)
                rep2((1, V)),                                          # bk  q^T / sqrt(E)
                rep2((V, V * E)),                                      # block-one-hot
                rep2((E, V * E)),                                      # V copies of I_E
                rep2((1, V * E)),                                      # gamma (tiled)
                rep2((1, V * E)),                                      # beta  (tiled)
            ],
            out_specs=pl.BlockSpec((block_b, F, V * E), lambda b: (b, 0, 0)),
        ),
        compiler_params=pltpu.CompilerParams(
            dimension_semantics=("parallel",),
            vmem_limit_bytes=vmem_limit,
        ),
    )(shared_field_embs, wv_t, bv, wk_q, bk_q, sel, til, gamma_full, beta_full)

    # [B, F, V*E] -> [B, F, V, E] is a free reshape (no transpose, no HBM pass).
    return out.reshape(B, F, V, E)


def reference(vk_emb, shared, params):
    """Pure-JAX re-implementation of the PyTorch forward for validation."""
    B, F, E = shared.shape
    V = vk_emb.shape[0]
    q = vk_emb @ params["wq"].T + params["bq"]
    flat = shared.reshape(-1, E)
    k = flat @ params["wk"].T + params["bk"]
    v = flat @ params["wv"].T + params["bv"]
    scores = (k @ q.T) / math.sqrt(float(E))
    scores = scores.reshape(B, F, V)
    attn = jax.nn.softmax(scores, axis=1)[..., None]        # (B, F, V, 1)
    val = v.reshape(B, F, 1, E)
    y = attn * val + shared[:, :, None, :]                  # (B, F, V, E)
    mean = y.mean(-1, keepdims=True)
    var = ((y - mean) ** 2).mean(-1, keepdims=True)
    return (y - mean) / jnp.sqrt(var + LN_EPS) * params["gamma"] + params["beta"]


if __name__ == "__main__":
    # batch, feature_num, vk_num, emb_size(feature_dim)
    B, F, V, E = 8, 8, 4, 32

    key = jax.random.PRNGKey(0)
    ks = jax.random.split(key, 8)
    vk_emb = jax.random.normal(ks[0], (V, E), jnp.float32)
    shared = jax.random.normal(ks[1], (B, F, E), jnp.float32)

    bound = 1.0 / math.sqrt(E)
    params = dict(
        wq=0.01 * jax.random.normal(ks[2], (E, E), jnp.float32),
        wk=0.01 * jax.random.normal(ks[3], (E, E), jnp.float32),
        wv=0.01 * jax.random.normal(ks[4], (E, E), jnp.float32),
        bq=jax.random.uniform(ks[5], (E,), jnp.float32, -bound, bound),
        bk=jax.random.uniform(ks[6], (E,), jnp.float32, -bound, bound),
        bv=jax.random.uniform(ks[7], (E,), jnp.float32, -bound, bound),
        gamma=jnp.ones((E,), jnp.float32),   # LayerNorm weight
        beta=jnp.zeros((E,), jnp.float32),   # LayerNorm bias
    )

    out = mvke_bottom_layer(vk_emb, shared, params)
    jax.block_until_ready(out)

    ref = reference(vk_emb, shared, params)
    assert out.shape == (B, F, V, E), out.shape
    np.testing.assert_allclose(np.asarray(out), np.asarray(ref), rtol=1e-4, atol=1e-5)
    print("KERNEL_OK")
</pallas_src>

<mosaic_0001>
module attributes {stable_mosaic.version = 11 : i64} {
  func.func @_mvke_kernel(%arg0: i32, %arg1: memref<8x8x32xf32, #tpu.memory_space<vmem>>, %arg2: memref<32x32xf32, #tpu.memory_space<vmem>>, %arg3: memref<1x32xf32, #tpu.memory_space<vmem>>, %arg4: memref<32x4xf32, #tpu.memory_space<vmem>>, %arg5: memref<1x4xf32, #tpu.memory_space<vmem>>, %arg6: memref<4x128xf32, #tpu.memory_space<vmem>>, %arg7: memref<32x128xf32, #tpu.memory_space<vmem>>, %arg8: memref<1x128xf32, #tpu.memory_space<vmem>>, %arg9: memref<1x128xf32, #tpu.memory_space<vmem>>, %arg10: memref<8x8x128xf32, #tpu.memory_space<vmem>>) attributes {dimension_semantics = [#tpu.dimension_semantics<parallel>], iteration_bounds = array<i64: 1>, scalar_prefetch = 0 : i64, scratch_operands = 0 : i64, tpu.core_type = #tpu.core_type<tc>, window_params = [{transform_indices = @transform_0, window_bounds = array<i64: 8, 8, 32>}, {pipeline_mode = #tpu.pipeline_mode<synchronous>, transform_indices = @transform_1, window_bounds = array<i64: 32, 32>}, {pipeline_mode = #tpu.pipeline_mode<synchronous>, transform_indices = @transform_2, window_bounds = array<i64: 1, 32>}, {pipeline_mode = #tpu.pipeline_mode<synchronous>, transform_indices = @transform_3, window_bounds = array<i64: 32, 4>}, {pipeline_mode = #tpu.pipeline_mode<synchronous>, transform_indices = @transform_4, window_bounds = array<i64: 1, 4>}, {pipeline_mode = #tpu.pipeline_mode<synchronous>, transform_indices = @transform_5, window_bounds = array<i64: 4, 128>}, {pipeline_mode = #tpu.pipeline_mode<synchronous>, transform_indices = @transform_6, window_bounds = array<i64: 32, 128>}, {pipeline_mode = #tpu.pipeline_mode<synchronous>, transform_indices = @transform_7, window_bounds = array<i64: 1, 128>}, {pipeline_mode = #tpu.pipeline_mode<synchronous>, transform_indices = @transform_8, window_bounds = array<i64: 1, 128>}, {transform_indices = @transform_9, window_bounds = array<i64: 8, 8, 128>}]} {
    %c0 = arith.constant 0 : index
    %c0_0 = arith.constant 0 : index
    %c0_1 = arith.constant 0 : index
    %0 = vector.load %arg1[%c0, %c0_0, %c0_1] : memref<8x8x32xf32, #tpu.memory_space<vmem>>, vector<8x8x32xf32>
    %1 = vector.shape_cast %0 : vector<8x8x32xf32> to vector<64x32xf32>
    %c0_2 = arith.constant 0 : index
    %c0_3 = arith.constant 0 : index
    %2 = vector.load %arg2[%c0_2, %c0_3] : memref<32x32xf32, #tpu.memory_space<vmem>>, vector<32x32xf32>
    %cst = arith.constant dense<0.000000e+00> : vector<64x32xf32>
    %3 = tpu.matmul %1, %2, %cst {dimension_numbers = #tpu.dot_dimension_numbers<[1], [0], [0], [1], [0, 0, 1, 1], [], []>} : vector<64x32xf32>, vector<32x32xf32>, vector<64x32xf32> -> vector<64x32xf32>
    %c0_4 = arith.constant 0 : index
    %c0_5 = arith.constant 0 : index
    %4 = vector.load %arg3[%c0_4, %c0_5] : memref<1x32xf32, #tpu.memory_space<vmem>>, vector<1x32xf32>
    %5 = vector.broadcast %4 : vector<1x32xf32> to vector<64x32xf32>
    %6 = arith.addf %3, %5 : vector<64x32xf32>
    %c0_6 = arith.constant 0 : index
    %c0_7 = arith.constant 0 : index
    %7 = vector.load %arg4[%c0_6, %c0_7] : memref<32x4xf32, #tpu.memory_space<vmem>>, vector<32x4xf32>
    %cst_8 = arith.constant dense<0.000000e+00> : vector<64x4xf32>
    %8 = tpu.matmul %1, %7, %cst_8 {dimension_numbers = #tpu.dot_dimension_numbers<[1], [0], [0], [1], [0, 0, 1, 1], [], []>} : vector<64x32xf32>, vector<32x4xf32>, vector<64x4xf32> -> vector<64x4xf32>
    %c0_9 = arith.constant 0 : index
    %c0_10 = arith.constant 0 : index
    %9 = vector.load %arg5[%c0_9, %c0_10] : memref<1x4xf32, #tpu.memory_space<vmem>>, vector<1x4xf32>
    %10 = vector.broadcast %9 : vector<1x4xf32> to vector<64x4xf32>
    %11 = arith.addf %8, %10 : vector<64x4xf32>
    %12 = vector.shape_cast %11 : vector<64x4xf32> to vector<8x8x4xf32>
    %cst_11 = arith.constant dense<0xFF800000> : vector<8x4xf32>
    %13 = vector.multi_reduction <maximumf>, %12, %cst_11 [1] : vector<8x8x4xf32> to vector<8x4xf32>
    %14 = vector.shape_cast %13 : vector<8x4xf32> to vector<8x1x4xf32>
    %15 = vector.broadcast %14 : vector<8x1x4xf32> to vector<8x8x4xf32>
    %16 = arith.subf %12, %15 : vector<8x8x4xf32>
    %17 = math.exp %16 : vector<8x8x4xf32>
    %cst_12 = arith.constant dense<0.000000e+00> : vector<8x4xf32>
    %18 = vector.multi_reduction <add>, %17, %cst_12 [1] : vector<8x8x4xf32> to vector<8x4xf32>
    %19 = vector.shape_cast %18 : vector<8x4xf32> to vector<8x1x4xf32>
    %20 = tpu.reciprocal %19 {approx = true} : vector<8x1x4xf32> -> vector<8x1x4xf32>
    %21 = arith.mulf %19, %20 : vector<8x1x4xf32>
    %cst_13 = arith.constant 2.000000e+00 : f32
    %22 = vector.broadcast %cst_13 : f32 to vector<8x1x4xf32>
    %23 = arith.subf %22, %21 : vector<8x1x4xf32>
    %24 = arith.mulf %20, %23 : vector<8x1x4xf32>
    %25 = vector.broadcast %24 : vector<8x1x4xf32> to vector<8x8x4xf32>
    %26 = arith.mulf %17, %25 : vector<8x8x4xf32>
    %27 = vector.shape_cast %26 : vector<8x8x4xf32> to vector<64x4xf32>
    %cst_14 = arith.constant dense<0.000000e+00> : vector<64xf32>
    %28 = vector.multi_reduction <add>, %6, %cst_14 [1] : vector<64x32xf32> to vector<64xf32>
    %29 = vector.shape_cast %28 : vector<64xf32> to vector<64x1xf32>
    %cst_15 = arith.constant 3.125000e-02 : f32
    %30 = vector.broadcast %cst_15 : f32 to vector<64x1xf32>
    %31 = arith.mulf %29, %30 : vector<64x1xf32>
    %cst_16 = arith.constant dense<0.000000e+00> : vector<64xf32>
    %32 = vector.multi_reduction <add>, %1, %cst_16 [1] : vector<64x32xf32> to vector<64xf32>
    %33 = vector.shape_cast %32 : vector<64xf32> to vector<64x1xf32>
    %cst_17 = arith.constant 3.125000e-02 : f32
    %34 = vector.broadcast %cst_17 : f32 to vector<64x1xf32>
    %35 = arith.mulf %33, %34 : vector<64x1xf32>
    %36 = vector.broadcast %31 : vector<64x1xf32> to vector<64x32xf32>
    %37 = arith.subf %6, %36 : vector<64x32xf32>
    %38 = vector.broadcast %35 : vector<64x1xf32> to vector<64x32xf32>
    %39 = arith.subf %1, %38 : vector<64x32xf32>
    %40 = arith.mulf %37, %37 : vector<64x32xf32>
    %cst_18 = arith.constant dense<0.000000e+00> : vector<64xf32>
    %41 = vector.multi_reduction <add>, %40, %cst_18 [1] : vector<64x32xf32> to vector<64xf32>
    %42 = vector.shape_cast %41 : vector<64xf32> to vector<64x1xf32>
    %cst_19 = arith.constant 3.125000e-02 : f32
    %43 = vector.broadcast %cst_19 : f32 to vector<64x1xf32>
    %44 = arith.mulf %42, %43 : vector<64x1xf32>
    %45 = arith.mulf %37, %39 : vector<64x32xf32>
    %cst_20 = arith.constant dense<0.000000e+00> : vector<64xf32>
    %46 = vector.multi_reduction <add>, %45, %cst_20 [1] : vector<64x32xf32> to vector<64xf32>
    %47 = vector.shape_cast %46 : vector<64xf32> to vector<64x1xf32>
    %cst_21 = arith.constant 3.125000e-02 : f32
    %48 = vector.broadcast %cst_21 : f32 to vector<64x1xf32>
    %49 = arith.mulf %47, %48 : vector<64x1xf32>
    %50 = arith.mulf %39, %39 : vector<64x32xf32>
    %cst_22 = arith.constant dense<0.000000e+00> : vector<64xf32>
    %51 = vector.multi_reduction <add>, %50, %cst_22 [1] : vector<64x32xf32> to vector<64xf32>
    %52 = vector.shape_cast %51 : vector<64xf32> to vector<64x1xf32>
    %cst_23 = arith.constant 3.125000e-02 : f32
    %53 = vector.broadcast %cst_23 : f32 to vector<64x1xf32>
    %54 = arith.mulf %52, %53 : vector<64x1xf32>
    %55 = arith.mulf %27, %27 : vector<64x4xf32>
    %56 = vector.broadcast %44 : vector<64x1xf32> to vector<64x4xf32>
    %57 = arith.mulf %55, %56 : vector<64x4xf32>
    %cst_24 = arith.constant 2.000000e+00 : f32
    %58 = vector.broadcast %cst_24 : f32 to vector<64x4xf32>
    %59 = arith.mulf %58, %27 : vector<64x4xf32>
    %60 = vector.broadcast %49 : vector<64x1xf32> to vector<64x4xf32>
    %61 = arith.mulf %59, %60 : vector<64x4xf32>
    %62 = arith.addf %57, %61 : vector<64x4xf32>
    %63 = vector.broadcast %54 : vector<64x1xf32> to vector<64x4xf32>
    %64 = arith.addf %62, %63 : vector<64x4xf32>
    %cst_25 = arith.constant 0.000000e+00 : f32
    %65 = vector.broadcast %cst_25 : f32 to vector<64x4xf32>
    %66 = arith.maximumf %64, %65 : vector<64x4xf32>
    %cst_26 = arith.constant 9.99999974E-6 : f32
    %67 = vector.broadcast %cst_26 : f32 to vector<64x4xf32>
    %68 = arith.addf %66, %67 : vector<64x4xf32>
    %69 = math.rsqrt %68 : vector<64x4xf32>
    %c0_27 = arith.constant 0 : index
    %c0_28 = arith.constant 0 : index
    %70 = vector.load %arg6[%c0_27, %c0_28] : memref<4x128xf32, #tpu.memory_space<vmem>>, vector<4x128xf32>
    %c0_29 = arith.constant 0 : index
    %c0_30 = arith.constant 0 : index
    %71 = vector.load %arg7[%c0_29, %c0_30] : memref<32x128xf32, #tpu.memory_space<vmem>>, vector<32x128xf32>
    %cst_31 = arith.constant dense<0.000000e+00> : vector<64x128xf32>
    %72 = tpu.matmul %27, %70, %cst_31 {dimension_numbers = #tpu.dot_dimension_numbers<[1], [0], [0], [1], [0, 0, 1, 1], [], []>} : vector<64x4xf32>, vector<4x128xf32>, vector<64x128xf32> -> vector<64x128xf32>
    %cst_32 = arith.constant dense<0.000000e+00> : vector<64x128xf32>
    %73 = tpu.matmul %69, %70, %cst_32 {dimension_numbers = #tpu.dot_dimension_numbers<[1], [0], [0], [1], [0, 0, 1, 1], [], []>} : vector<64x4xf32>, vector<4x128xf32>, vector<64x128xf32> -> vector<64x128xf32>
    %cst_33 = arith.constant dense<0.000000e+00> : vector<64x128xf32>
    %74 = tpu.matmul %37, %71, %cst_33 {dimension_numbers = #tpu.dot_dimension_numbers<[1], [0], [0], [1], [0, 0, 1, 1], [], []>} : vector<64x32xf32>, vector<32x128xf32>, vector<64x128xf32> -> vector<64x128xf32>
    %cst_34 = arith.constant dense<0.000000e+00> : vector<64x128xf32>
    %75 = tpu.matmul %39, %71, %cst_34 {dimension_numbers = #tpu.dot_dimension_numbers<[1], [0], [0], [1], [0, 0, 1, 1], [], []>} : vector<64x32xf32>, vector<32x128xf32>, vector<64x128xf32> -> vector<64x128xf32>
    %76 = arith.mulf %72, %74 : vector<64x128xf32>
    %77 = arith.addf %76, %75 : vector<64x128xf32>
    %78 = arith.mulf %77, %73 : vector<64x128xf32>
    %c0_35 = arith.constant 0 : index
    %c0_36 = arith.constant 0 : index
    %79 = vector.load %arg8[%c0_35, %c0_36] : memref<1x128xf32, #tpu.memory_space<vmem>>, vector<1x128xf32>
    %80 = vector.broadcast %79 : vector<1x128xf32> to vector<64x128xf32>
    %81 = arith.mulf %78, %80 : vector<64x128xf32>
    %c0_37 = arith.constant 0 : index
    %c0_38 = arith.constant 0 : index
    %82 = vector.load %arg9[%c0_37, %c0_38] : memref<1x128xf32, #tpu.memory_space<vmem>>, vector<1x128xf32>
    %83 = vector.broadcast %82 : vector<1x128xf32> to vector<64x128xf32>
    %84 = arith.addf %81, %83 : vector<64x128xf32>
    %85 = vector.shape_cast %84 : vector<64x128xf32> to vector<8x8x128xf32>
    %c0_39 = arith.constant 0 : index
    %c0_40 = arith.constant 0 : index
    %c0_41 = arith.constant 0 : index
    %86 = vector.load %arg10[%c0_39, %c0_40, %c0_41] : memref<8x8x128xf32, #tpu.memory_space<vmem>>, vector<8x8x128xf32>
    tpu.vector_store %arg10[%c0_39, %c0_40, %c0_41], %85 {strides = array<i32>} : memref<8x8x128xf32, #tpu.memory_space<vmem>>, vector<8x8x128xf32>,
    return
  }
  func.func @transform_0(%arg0: i32) -> (i32, i32, i32) {
    %c0_i32 = arith.constant 0 : i32
    %c0_i32_0 = arith.constant 0 : i32
    %c0_i32_1 = arith.constant 0 : i32
    return %arg0, %c0_i32, %c0_i32_0 : i32, i32, i32
  }
  func.func @transform_1(%arg0: i32) -> (i32, i32) {
    %c0_i32 = arith.constant 0 : i32
    %c0_i32_0 = arith.constant 0 : i32
    %c0_i32_1 = arith.constant 0 : i32
    return %c0_i32, %c0_i32_0 : i32, i32
  }
  func.func @transform_2(%arg0: i32) -> (i32, i32) {
    %c0_i32 = arith.constant 0 : i32
    %c0_i32_0 = arith.constant 0 : i32
    %c0_i32_1 = arith.constant 0 : i32
    return %c0_i32, %c0_i32_0 : i32, i32
  }
  func.func @transform_3(%arg0: i32) -> (i32, i32) {
    %c0_i32 = arith.constant 0 : i32
    %c0_i32_0 = arith.constant 0 : i32
    %c0_i32_1 = arith.constant 0 : i32
    return %c0_i32, %c0_i32_0 : i32, i32
  }
  func.func @transform_4(%arg0: i32) -> (i32, i32) {
    %c0_i32 = arith.constant 0 : i32
    %c0_i32_0 = arith.constant 0 : i32
    %c0_i32_1 = arith.constant 0 : i32
    return %c0_i32, %c0_i32_0 : i32, i32
  }
  func.func @transform_5(%arg0: i32) -> (i32, i32) {
    %c0_i32 = arith.constant 0 : i32
    %c0_i32_0 = arith.constant 0 : i32
    %c0_i32_1 = arith.constant 0 : i32
    return %c0_i32, %c0_i32_0 : i32, i32
  }
  func.func @transform_6(%arg0: i32) -> (i32, i32) {
    %c0_i32 = arith.constant 0 : i32
    %c0_i32_0 = arith.constant 0 : i32
    %c0_i32_1 = arith.constant 0 : i32
    return %c0_i32, %c0_i32_0 : i32, i32
  }
  func.func @transform_7(%arg0: i32) -> (i32, i32) {
    %c0_i32 = arith.constant 0 : i32
    %c0_i32_0 = arith.constant 0 : i32
    %c0_i32_1 = arith.constant 0 : i32
    return %c0_i32, %c0_i32_0 : i32, i32
  }
  func.func @transform_8(%arg0: i32) -> (i32, i32) {
    %c0_i32 = arith.constant 0 : i32
    %c0_i32_0 = arith.constant 0 : i32
    %c0_i32_1 = arith.constant 0 : i32
    return %c0_i32, %c0_i32_0 : i32, i32
  }
  func.func @transform_9(%arg0: i32) -> (i32, i32, i32) {
    %c0_i32 = arith.constant 0 : i32
    %c0_i32_0 = arith.constant 0 : i32
    %c0_i32_1 = arith.constant 0 : i32
    return %arg0, %c0_i32, %c0_i32_0 : i32, i32, i32
  }
}

</mosaic_0001>

<llo_original>
// kernel: tpu_custom_call.1
$region0: #{tpu_custom_call.1}
  #allocation0 [shape = 'u32[]', space=smem, size = 0x4, offset = 0x4, fixed_abs, tag = 'smem constant byte address 0x4 - core index']
  #allocation1 [shape = 'u32[144,128]{1,0:T(1,128)}', space=vmem, size = 0x12000, scoped, tag = 'internal scratch']
  %s0 = inlined_call_operand.hbm [shape: f32[8,8,32], index: 0, kind: input, shape index: {}]
  %s1 = inlined_call_operand.vmem [shape: f32[32,32], index: 1, kind: input, shape index: {}]
  %s2 = inlined_call_operand.vmem [shape: f32[1,32], index: 2, kind: input, shape index: {}]
  %s3 = inlined_call_operand.vmem [shape: f32[32,4], index: 3, kind: input, shape index: {}]
  %s4 = inlined_call_operand.vmem [shape: f32[1,4], index: 4, kind: input, shape index: {}]
  %s5 = inlined_call_operand.vmem [shape: f32[4,128], index: 5, kind: input, shape index: {}]
  %s6 = inlined_call_operand.hbm [shape: f32[32,128], index: 6, kind: input, shape index: {}]
  %s7 = inlined_call_operand.vmem [shape: f32[1,128], index: 7, kind: input, shape index: {}]
  %s8 = inlined_call_operand.vmem [shape: f32[1,128], index: 8, kind: input, shape index: {}]
  %s9 = inlined_call_operand.hbm [shape: f32[8,8,128], index: 9, kind: output, shape index: {}]
  %s10 = sld [smem:[#allocation0]]
  $region54: #{tpu_custom_call.1} parent=0
    _
  %s12 = ssub.s32 1, %s10
  %s13 = scalar_select 0, %s12, %s10
  $region1: #{tpu_custom_call.1} parent=0
    #allocation2 [shape = 'u8[32768]{0}', space=vmem, size = 0x8000, scoped, tag = 'input window, operand 0, single buffered']
    #allocation3 [shape = 's32[1]{0}', space=sflag, size = 0x4, scoped, tag = 'scoped memory for tpu_custom_call.1']
    #allocation4 [shape = 's32[1]{0}', space=sflag, size = 0x4, scoped, tag = 'scoped memory for tpu_custom_call.1']
    #allocation5 [shape = 'u8[16384]{0}', space=vmem, size = 0x4000, scoped, tag = 'input window, operand 6, single buffered']
    #allocation6 [shape = 's32[1]{0}', space=sflag, size = 0x4, scoped, tag = 'scoped memory for tpu_custom_call.1']
    #allocation7 [shape = 'u8[32768]{0}', space=vmem, size = 0x8000, scoped, tag = 'output window, operand 0, single buffered']
    %14 = vsyncpa [#allocation3], 0
    %15 = vsyncpa [#allocation6], 0
    %16 = vsyncpa [#allocation4], 0
    // Predicated region
    $region2: #{tpu_custom_call.1} parent=1 // pred_check
      _
    $region3: #{tpu_custom_call.1} parent=1 // pred_check_branch
      %18 = sbr.rel (0) target = $region5
    $region4: #{tpu_custom_call.1} parent=1 // pred_region
      %s20 = ssub.s32 1024, 1024
      %21 = vsyncadd [#allocation3], %s20
      %s22 = sshll.u32 [#allocation2], 4
      %s23 = int_to_ptr.vmem [resolvable:$true] %s22
      %28 = dma.hbm_to_vmem [thread:$0]  %s0, 1024, %s23, [#allocation3], 128, 128, 8
    $region5: #{tpu_custom_call.1} parent=1 // pred_fallthru
      _
    // Predicated region
    $region6: #{tpu_custom_call.1} parent=1 // pred_check
      _
    $region7: #{tpu_custom_call.1} parent=1 // pred_check_branch
      %30 = sbr.rel (0) target = $region9
    $region8: #{tpu_custom_call.1} parent=1 // pred_region
      _
    $region9: #{tpu_custom_call.1} parent=1 // pred_fallthru
      _
    // Predicated region
    $region10: #{tpu_custom_call.1} parent=1 // pred_check
      _
    $region11: #{tpu_custom_call.1} parent=1 // pred_check_branch
      %32 = sbr.rel (0) target = $region13
    $region12: #{tpu_custom_call.1} parent=1 // pred_region
      _
    $region13: #{tpu_custom_call.1} parent=1 // pred_fallthru
      _
    // Predicated region
    $region14: #{tpu_custom_call.1} parent=1 // pred_check
      _
    $region15: #{tpu_custom_call.1} parent=1 // pred_check_branch
      %34 = sbr.rel (0) target = $region17
    $region16: #{tpu_custom_call.1} parent=1 // pred_region
      _
    $region17: #{tpu_custom_call.1} parent=1 // pred_fallthru
      _
    // Predicated region
    $region18: #{tpu_custom_call.1} parent=1 // pred_check
      _
    $region19: #{tpu_custom_call.1} parent=1 // pred_check_branch
      %36 = sbr.rel (0) target = $region21
    $region20: #{tpu_custom_call.1} parent=1 // pred_region
      _
    $region21: #{tpu_custom_call.1} parent=1 // pred_fallthru
      _
    // Predicated region
    $region22: #{tpu_custom_call.1} parent=1 // pred_check
      _
    $region23: #{tpu_custom_call.1} parent=1 // pred_check_branch
      %38 = sbr.rel (0) target = $region25
    $region24: #{tpu_custom_call.1} parent=1 // pred_region
      _
    $region25: #{tpu_custom_call.1} parent=1 // pred_fallthru
      _
    // Predicated region
    $region26: #{tpu_custom_call.1} parent=1 // pred_check
      _
    $region27: #{tpu_custom_call.1} parent=1 // pred_check_branch
      %40 = sbr.rel (0) target = $region29
    $region28: #{tpu_custom_call.1} parent=1 // pred_region
      %s42 = ssub.s32 512, 512
      %43 = vsyncadd [#allocation6], %s42
      %s44 = sshll.u32 [#allocation5], 4
      %s45 = int_to_ptr.vmem [resolvable:$true] %s44
      %50 = dma.hbm_to_vmem [thread:$0]  %s6, 512, %s45, [#allocation6], 128, 128, 8
    $region29: #{tpu_custom_call.1} parent=1 // pred_fallthru
      _
    // Predicated region
    $region30: #{tpu_custom_call.1} parent=1 // pred_check
      _
    $region31: #{tpu_custom_call.1} parent=1 // pred_check_branch
      %52 = sbr.rel (0) target = $region33
    $region32: #{tpu_custom_call.1} parent=1 // pred_region
      _
    $region33: #{tpu_custom_call.1} parent=1 // pred_fallthru
      _
    // Predicated region
    $region34: #{tpu_custom_call.1} parent=1 // pred_check
      _
    $region35: #{tpu_custom_call.1} parent=1 // pred_check_branch
      %54 = sbr.rel (0) target = $region37
    $region36: #{tpu_custom_call.1} parent=1 // pred_region
      _
    $region37: #{tpu_custom_call.1} parent=1 // pred_fallthru
      _
    // Predicated region
    $region38: #{tpu_custom_call.1} parent=1 // pred_check
      _
    $region39: #{tpu_custom_call.1} parent=1 // pred_check_branch
      %56 = sbr.rel (0) target = $region41
    $region40: #{tpu_custom_call.1} parent=1 // pred_region
      %57 = dma.done [#allocation3], 1024
    $region41: #{tpu_custom_call.1} parent=1 // pred_fallthru
      _
    // Predicated region
    $region42: #{tpu_custom_call.1} parent=1 // pred_check
      _
    $region43: #{tpu_custom_call.1} parent=1 // pred_check_branch
      %59 = sbr.rel (0) target = $region45
    $region44: #{tpu_custom_call.1} parent=1 // pred_region
      %60 = dma.done [#allocation6], 512
    $region45: #{tpu_custom_call.1} parent=1 // pred_fallthru
      _
    %v61 = vld [vmem:[#allocation2] sm:$0xff]
    %v62 = vld [vmem:[#allocation2 + $0x8] sm:$0xff]
    %v63 = vld [vmem:[#allocation2 + $0x10] sm:$0xff]
    %v64 = vld [vmem:[#allocation2 + $0x18] sm:$0xff]
    %v65 = vld [vmem:[#allocation2 + $0x20] sm:$0xff]
    %v66 = vld [vmem:[#allocation2 + $0x28] sm:$0xff]
    %v67 = vld [vmem:[#allocation2 + $0x30] sm:$0xff]
    %v68 = vld [vmem:[#allocation2 + $0x38] sm:$0xff]
    %v69 = vld [vmem:[%s1] sm:$0xff]
    %v70 = vld [vmem:[%s1 + $0x8] sm:$0xff]
    %v71 = vld [vmem:[%s1 + $0x10] sm:$0xff]
    %v72 = vld [vmem:[%s1 + $0x18] sm:$0xff]
    %v73 = vld [vmem:[%s2] sm:$0x1]
    %v75 = vlaneseq
    %v76 = vshrl.u32 %v75, 7
    %v77 = vsub.s32 0, %v76
    %v78 = vrot.slane %v73, %v77
    %vm80 = vcmask 261120
    %v82 = vsel %vm80, %v61, 0
    %v85 = vsel %vm80, %v62, 0
    %v88 = vsel %vm80, %v63, 0
    %v91 = vsel %vm80, %v64, 0
    %v94 = vsel %vm80, %v65, 0
    %v97 = vsel %vm80, %v66, 0
    %v100 = vsel %vm80, %v67, 0
    %v103 = vsel %vm80, %v68, 0
    %105 = vmatprep.subr.mxu0 0.0
    %106 = vmatpush1.msra.mxu0 0.0
    %107 = vmatprep.subr.mxu0 0.0
    %108 = vmatpush1.msra.mxu0 0.0
    %109 = vmatprep.subr.mxu0 0.0
    %110 = vmatpush1.msra.mxu0 0.0
    %111 = vmatprep.subr.mxu0 0.0
    %112 = vmatpush1.msra.mxu0 0.0
    %113 = vmatprep.subr.mxu0 0.0
    %114 = vmatpush1.msra.mxu0 0.0
    %115 = vmatprep.subr.mxu0 0.0
    %116 = vmatpush1.msra.mxu0 0.0
    %117 = vmatprep.subr.mxu0 0.0
    %118 = vmatpush1.msra.mxu0 0.0
    %119 = vmatprep.subr.mxu0 0.0
    %120 = vmatpush1.msra.mxu0 0.0
    %121 = vmatprep.subr.mxu0 0.0
    %122 = vmatpush1.msra.mxu0 0.0
    %123 = vmatprep.subr.mxu0 0.0
    %124 = vmatpush1.msra.mxu0 0.0
    %125 = vmatprep.subr.mxu0 0.0
    %126 = vmatpush1.msra.mxu0 0.0
    %127 = vmatprep.subr.mxu0 0.0
    %128 = vmatpush1.msra.mxu0 0.0
    %129 = vmatprep.subr.mxu0 0.0
    %130 = vmatpush1.msra.mxu0 %v72
    %131 = vmatprep.subr.mxu0 0.0
    %132 = vmatpush1.msra.mxu0 %v71
    %133 = vmatprep.subr.mxu0 0.0
    %134 = vmatpush1.msra.mxu0 %v70
    %135 = vmatprep.subr.mxu0 0.0
    %136 = vmatpush1.msra.mxu0 %v69
    %137 = vmatprep.subr.mxu0 0.0
    %138 = vmatpush2.msra.mxu0 0.0
    %139 = vmatprep.subr.mxu0 0.0
    %140 = vmatpush2.msra.mxu0 0.0
    %141 = vmatprep.subr.mxu0 0.0
    %142 = vmatpush2.msra.mxu0 0.0
    %143 = vmatprep.subr.mxu0 0.0
    %144 = vmatpush2.msra.mxu0 0.0
    %145 = vmatprep.subr.mxu0 0.0
    %146 = vmatpush2.msra.mxu0 0.0
    %147 = vmatprep.subr.mxu0 0.0
    %148 = vmatpush2.msra.mxu0 0.0
    %149 = vmatprep.subr.mxu0 0.0
    %150 = vmatpush2.msra.mxu0 0.0
    %151 = vmatprep.subr.mxu0 0.0
    %152 = vmatpush2.msra.mxu0 0.0
    %153 = vmatprep.subr.mxu0 0.0
    %154 = vmatpush2.msra.mxu0 0.0
    %155 = vmatprep.subr.mxu0 0.0
    %156 = vmatpush2.msra.mxu0 0.0
    %157 = vmatprep.subr.mxu0 0.0
    %158 = vmatpush2.msra.mxu0 0.0
    %159 = vmatprep.subr.mxu0 0.0
    %160 = vmatpush2.msra.mxu0 0.0
    %161 = vmatprep.subr.mxu0 0.0
    %162 = vmatpush2.msra.mxu0 0.0
    %163 = vmatprep.subr.mxu0 0.0
    %164 = vmatpush2.msra.mxu0 0.0
    %165 = vmatprep.subr.mxu0 0.0
    %166 = vmatpush2.msra.mxu0 0.0
    %167 = vmatprep.subr.mxu0 0.0
    %168 = vmatpush2.msra.mxu0 0.0
    %169 = vmatprep.mubr.f32.mxu0 0.0
    %170 = vmatmul.mubr.f32.gmra.mxu0 %v82
    %v171 = vpop.f32.mrf.mxu0
    %v172 = vadd.f32 %v78, %v171
    %v173 = vpop.f32.mrf.mxu0
    %174 = vmatprep.mubr.f32.mxu0 0.0
    %175 = vmatmul.mubr.f32.gmra.mxu0 %v85
    %v176 = vpop.f32.mrf.mxu0
    %v177 = vadd.f32 %v78, %v176
    %v178 = vpop.f32.mrf.mxu0
    %179 = vmatprep.mubr.f32.mxu0 0.0
    %180 = vmatmul.mubr.f32.gmra.mxu0 %v88
    %v181 = vpop.f32.mrf.mxu0
    %v182 = vadd.f32 %v78, %v181
    %v183 = vpop.f32.mrf.mxu0
    %184 = vmatprep.mubr.f32.mxu0 0.0
    %185 = vmatmul.mubr.f32.gmra.mxu0 %v91
    %v186 = vpop.f32.mrf.mxu0
    %v187 = vadd.f32 %v78, %v186
    %v188 = vpop.f32.mrf.mxu0
    %189 = vmatprep.mubr.f32.mxu0 0.0
    %190 = vmatmul.mubr.f32.gmra.mxu0 %v94
    %v191 = vpop.f32.mrf.mxu0
    %v192 = vadd.f32 %v78, %v191
    %v193 = vpop.f32.mrf.mxu0
    %194 = vmatprep.mubr.f32.mxu0 0.0
    %195 = vmatmul.mubr.f32.gmra.mxu0 %v97
    %v196 = vpop.f32.mrf.mxu0
    %v197 = vadd.f32 %v78, %v196
    %v198 = vpop.f32.mrf.mxu0
    %199 = vmatprep.mubr.f32.mxu0 0.0
    %200 = vmatmul.mubr.f32.gmra.mxu0 %v100
    %v201 = vpop.f32.mrf.mxu0
    %v202 = vadd.f32 %v78, %v201
    %v203 = vpop.f32.mrf.mxu0
    %204 = vmatprep.mubr.f32.mxu0 0.0
    %205 = vmatmul.mubr.f32.gmra.mxu0 %v103
    %v206 = vpop.f32.mrf.mxu0
    %v207 = vadd.f32 %v78, %v206
    %v208 = vpop.f32.mrf.mxu0
    %209 = vdwg.mxu0
    %v210 = vld [vmem:[%s3] sm:$0xff]
    %v211 = vld [vmem:[%s3 + $0x8] sm:$0xff]
    %v212 = vld [vmem:[%s3 + $0x10] sm:$0xff]
    %v213 = vld [vmem:[%s3 + $0x18] sm:$0xff]
    %v214 = vld [vmem:[%s4] sm:$0x1]
    %v216 = vlaneseq
    %v217 = vshrl.u32 %v216, 7
    %v218 = vsub.s32 0, %v217
    %v219 = vrot.slane %v214, %v218
    %221 = vmatprep.subr.mxu0 0.0
    %222 = vmatpush1.msra.mxu0 0.0
    %223 = vmatprep.subr.mxu0 0.0
    %224 = vmatpush1.msra.mxu0 0.0
    %225 = vmatprep.subr.mxu0 0.0
    %226 = vmatpush1.msra.mxu0 0.0
    %227 = vmatprep.subr.mxu0 0.0
    %228 = vmatpush1.msra.mxu0 0.0
    %229 = vmatprep.subr.mxu0 0.0
    %230 = vmatpush1.msra.mxu0 0.0
    %231 = vmatprep.subr.mxu0 0.0
    %232 = vmatpush1.msra.mxu0 0.0
    %233 = vmatprep.subr.mxu0 0.0
    %234 = vmatpush1.msra.mxu0 0.0
    %235 = vmatprep.subr.mxu0 0.0
    %236 = vmatpush1.msra.mxu0 0.0
    %237 = vmatprep.subr.mxu0 0.0
    %238 = vmatpush1.msra.mxu0 0.0
    %239 = vmatprep.subr.mxu0 0.0
    %240 = vmatpush1.msra.mxu0 0.0
    %241 = vmatprep.subr.mxu0 0.0
    %242 = vmatpush1.msra.mxu0 0.0
    %243 = vmatprep.subr.mxu0 0.0
    %244 = vmatpush1.msra.mxu0 0.0
    %245 = vmatprep.subr.mxu0 0.0
    %246 = vmatpush1.msra.mxu0 %v213
    %247 = vmatprep.subr.mxu0 0.0
    %248 = vmatpush1.msra.mxu0 %v212
    %249 = vmatprep.subr.mxu0 0.0
    %250 = vmatpush1.msra.mxu0 %v211
    %251 = vmatprep.subr.mxu0 0.0
    %252 = vmatpush1.msra.mxu0 %v210
    %253 = vmatprep.subr.mxu0 0.0
    %254 = vmatpush2.msra.mxu0 0.0
    %255 = vmatprep.subr.mxu0 0.0
    %256 = vmatpush2.msra.mxu0 0.0
    %257 = vmatprep.subr.mxu0 0.0
    %258 = vmatpush2.msra.mxu0 0.0
    %259 = vmatprep.subr.mxu0 0.0
    %260 = vmatpush2.msra.mxu0 0.0
    %261 = vmatprep.subr.mxu0 0.0
    %262 = vmatpush2.msra.mxu0 0.0
    %263 = vmatprep.subr.mxu0 0.0
    %264 = vmatpush2.msra.mxu0 0.0
    %265 = vmatprep.subr.mxu0 0.0
    %266 = vmatpush2.msra.mxu0 0.0
    %267 = vmatprep.subr.mxu0 0.0
    %268 = vmatpush2.msra.mxu0 0.0
    %269 = vmatprep.subr.mxu0 0.0
    %270 = vmatpush2.msra.mxu0 0.0
    %271 = vmatprep.subr.mxu0 0.0
    %272 = vmatpush2.msra.mxu0 0.0
    %273 = vmatprep.subr.mxu0 0.0
    %274 = vmatpush2.msra.mxu0 0.0
    %275 = vmatprep.subr.mxu0 0.0
    %276 = vmatpush2.msra.mxu0 0.0
    %277 = vmatprep.subr.mxu0 0.0
    %278 = vmatpush2.msra.mxu0 0.0
    %279 = vmatprep.subr.mxu0 0.0
    %280 = vmatpush2.msra.mxu0 0.0
    %281 = vmatprep.subr.mxu0 0.0
    %282 = vmatpush2.msra.mxu0 0.0
    %283 = vmatprep.subr.mxu0 0.0
    %284 = vmatpush2.msra.mxu0 0.0
    %285 = vmatprep.mubr.f32.mxu0 0.0
    %286 = vmatmul.mubr.f32.gmra.mxu0 %v82
    %v287 = vpop.f32.mrf.mxu0
    %v288 = vadd.f32 %v219, %v287
    %v289 = vpop.f32.mrf.mxu0
    %290 = vmatprep.mubr.f32.mxu0 0.0
    %291 = vmatmul.mubr.f32.gmra.mxu0 %v85
    %v292 = vpop.f32.mrf.mxu0
    %v293 = vadd.f32 %v219, %v292
    %v294 = vpop.f32.mrf.mxu0
    %295 = vmatprep.mubr.f32.mxu0 0.0
    %296 = vmatmul.mubr.f32.gmra.mxu0 %v88
    %v297 = vpop.f32.mrf.mxu0
    %v298 = vadd.f32 %v219, %v297
    %v299 = vpop.f32.mrf.mxu0
    %300 = vmatprep.mubr.f32.mxu0 0.0
    %301 = vmatmul.mubr.f32.gmra.mxu0 %v91
    %v302 = vpop.f32.mrf.mxu0
    %v303 = vadd.f32 %v219, %v302
    %v304 = vpop.f32.mrf.mxu0
    %305 = vmatprep.mubr.f32.mxu0 0.0
    %306 = vmatmul.mubr.f32.gmra.mxu0 %v94
    %v307 = vpop.f32.mrf.mxu0
    %v308 = vadd.f32 %v219, %v307
    %v309 = vpop.f32.mrf.mxu0
    %310 = vmatprep.mubr.f32.mxu0 0.0
    %311 = vmatmul.mubr.f32.gmra.mxu0 %v97
    %v312 = vpop.f32.mrf.mxu0
    %v313 = vadd.f32 %v219, %v312
    %v314 = vpop.f32.mrf.mxu0
    %315 = vmatprep.mubr.f32.mxu0 0.0
    %316 = vmatmul.mubr.f32.gmra.mxu0 %v100
    %v317 = vpop.f32.mrf.mxu0
    %v318 = vadd.f32 %v219, %v317
    %v319 = vpop.f32.mrf.mxu0
    %320 = vmatprep.mubr.f32.mxu0 0.0
    %321 = vmatmul.mubr.f32.gmra.mxu0 %v103
    %v322 = vpop.f32.mrf.mxu0
    %v323 = vadd.f32 %v219, %v322
    %v324 = vpop.f32.mrf.mxu0
    %325 = vdwg.mxu0
    %vm326 = vcmask 31744
    %v327 = vsel %vm326, %v288, -inf
    %v328 = vrot.slane %v327, 4
    %v329 = vmax.f32 %v327, %v328
    %v330 = vrot.slane %v329, 2
    %v331 = vmax.f32 %v329, %v330
    %v332 = vrot.slane %v331, 1
    %v333 = vmax.f32 %v331, %v332
    %v334 = vsel %vm326, %v293, -inf
    %v335 = vrot.slane %v334, 4
    %v336 = vmax.f32 %v334, %v335
    %v337 = vrot.slane %v336, 2
    %v338 = vmax.f32 %v336, %v337
    %v339 = vrot.slane %v338, 1
    %v340 = vmax.f32 %v338, %v339
    %v341 = vsel %vm326, %v298, -inf
    %v342 = vrot.slane %v341, 4
    %v343 = vmax.f32 %v341, %v342
    %v344 = vrot.slane %v343, 2
    %v345 = vmax.f32 %v343, %v344
    %v346 = vrot.slane %v345, 1
    %v347 = vmax.f32 %v345, %v346
    %v348 = vsel %vm326, %v303, -inf
    %v349 = vrot.slane %v348, 4
    %v350 = vmax.f32 %v348, %v349
    %v351 = vrot.slane %v350, 2
    %v352 = vmax.f32 %v350, %v351
    %v353 = vrot.slane %v352, 1
    %v354 = vmax.f32 %v352, %v353
    %v355 = vsel %vm326, %v308, -inf
    %v356 = vrot.slane %v355, 4
    %v357 = vmax.f32 %v355, %v356
    %v358 = vrot.slane %v357, 2
    %v359 = vmax.f32 %v357, %v358
    %v360 = vrot.slane %v359, 1
    %v361 = vmax.f32 %v359, %v360
    %v362 = vsel %vm326, %v313, -inf
    %v363 = vrot.slane %v362, 4
    %v364 = vmax.f32 %v362, %v363
    %v365 = vrot.slane %v364, 2
    %v366 = vmax.f32 %v364, %v365
    %v367 = vrot.slane %v366, 1
    %v368 = vmax.f32 %v366, %v367
    %v369 = vsel %vm326, %v318, -inf
    %v370 = vrot.slane %v369, 4
    %v371 = vmax.f32 %v369, %v370
    %v372 = vrot.slane %v371, 2
    %v373 = vmax.f32 %v371, %v372
    %v374 = vrot.slane %v373, 1
    %v375 = vmax.f32 %v373, %v374
    %v376 = vsel %vm326, %v323, -inf
    %v377 = vrot.slane %v376, 4
    %v378 = vmax.f32 %v376, %v377
    %v379 = vrot.slane %v378, 2
    %v380 = vmax.f32 %v378, %v379
    %v381 = vrot.slane %v380, 1
    %v382 = vmax.f32 %v380, %v381
    %v383 = vsub.f32 %v288, %v333
    %v384 = vsub.f32 %v293, %v340
    %v385 = vsub.f32 %v298, %v347
    %v386 = vsub.f32 %v303, %v354
    %v387 = vsub.f32 %v308, %v361
    %v388 = vsub.f32 %v313, %v368
    %v389 = vsub.f32 %v318, %v375
    %v390 = vsub.f32 %v323, %v382
    %v391 = vmul.f32 %v383, 1.442695
    %v392 = vpow.pop %v391
    %v393 = vmul.f32 %v384, 1.442695
    %v394 = vpow.pop %v393
    %v395 = vmul.f32 %v385, 1.442695
    %v396 = vpow.pop %v395
    %v397 = vmul.f32 %v386, 1.442695
    %v398 = vpow.pop %v397
    %v399 = vmul.f32 %v387, 1.442695
    %v400 = vpow.pop %v399
    %v401 = vmul.f32 %v388, 1.442695
    %v402 = vpow.pop %v401
    %v403 = vmul.f32 %v389, 1.442695
    %v404 = vpow.pop %v403
    %v405 = vmul.f32 %v390, 1.442695
    %v406 = vpow.pop %v405
    %v407 = vsel %vm326, %v392, 0.0
    %v408 = vrot.slane %v407, 4
    %v409 = vadd.f32 %v407, %v408
    %v410 = vrot.slane %v409, 2
    %v411 = vadd.f32 %v409, %v410
    %v412 = vrot.slane %v411, 1
    %v413 = vadd.f32 %v411, %v412
    %v414 = vsel %vm326, %v394, 0.0
    %v415 = vrot.slane %v414, 4
    %v416 = vadd.f32 %v414, %v415
    %v417 = vrot.slane %v416, 2
    %v418 = vadd.f32 %v416, %v417
    %v419 = vrot.slane %v418, 1
    %v420 = vadd.f32 %v418, %v419
    %v421 = vsel %vm326, %v396, 0.0
    %v422 = vrot.slane %v421, 4
    %v423 = vadd.f32 %v421, %v422
    %v424 = vrot.slane %v423, 2
    %v425 = vadd.f32 %v423, %v424
    %v426 = vrot.slane %v425, 1
    %v427 = vadd.f32 %v425, %v426
    %v428 = vsel %vm326, %v398, 0.0
    %v429 = vrot.slane %v428, 4
    %v430 = vadd.f32 %v428, %v429
    %v431 = vrot.slane %v430, 2
    %v432 = vadd.f32 %v430, %v431
    %v433 = vrot.slane %v432, 1
    %v434 = vadd.f32 %v432, %v433
    %v435 = vsel %vm326, %v400, 0.0
    %v436 = vrot.slane %v435, 4
    %v437 = vadd.f32 %v435, %v436
    %v438 = vrot.slane %v437, 2
    %v439 = vadd.f32 %v437, %v438
    %v440 = vrot.slane %v439, 1
    %v441 = vadd.f32 %v439, %v440
    %v442 = vsel %vm326, %v402, 0.0
    %v443 = vrot.slane %v442, 4
    %v444 = vadd.f32 %v442, %v443
    %v445 = vrot.slane %v444, 2
    %v446 = vadd.f32 %v444, %v445
    %v447 = vrot.slane %v446, 1
    %v448 = vadd.f32 %v446, %v447
    %v449 = vsel %vm326, %v404, 0.0
    %v450 = vrot.slane %v449, 4
    %v451 = vadd.f32 %v449, %v450
    %v452 = vrot.slane %v451, 2
    %v453 = vadd.f32 %v451, %v452
    %v454 = vrot.slane %v453, 1
    %v455 = vadd.f32 %v453, %v454
    %v456 = vsel %vm326, %v406, 0.0
    %v457 = vrot.slane %v456, 4
    %v458 = vadd.f32 %v456, %v457
    %v459 = vrot.slane %v458, 2
    %v460 = vadd.f32 %v458, %v459
    %v461 = vrot.slane %v460, 1
    %v462 = vadd.f32 %v460, %v461
    %v463 = vrcp.pop %v413
    %v464 = vrcp.pop %v420
    %v465 = vrcp.pop %v427
    %v466 = vrcp.pop %v434
    %v467 = vrcp.pop %v441
    %v468 = vrcp.pop %v448
    %v469 = vrcp.pop %v455
    %v470 = vrcp.pop %v462
    %v471 = vmul.f32 %v413, %v463
    %v472 = vmul.f32 %v420, %v464
    %v473 = vmul.f32 %v427, %v465
    %v474 = vmul.f32 %v434, %v466
    %v475 = vmul.f32 %v441, %v467
    %v476 = vmul.f32 %v448, %v468
    %v477 = vmul.f32 %v455, %v469
    %v478 = vmul.f32 %v462, %v470
    %v479 = vsub.f32 2.0, %v471
    %v480 = vsub.f32 2.0, %v472
    %v481 = vsub.f32 2.0, %v473
    %v482 = vsub.f32 2.0, %v474
    %v483 = vsub.f32 2.0, %v475
    %v484 = vsub.f32 2.0, %v476
    %v485 = vsub.f32 2.0, %v477
    %v486 = vsub.f32 2.0, %v478
    %v487 = vmul.f32 %v463, %v479
    %v488 = vmul.f32 %v464, %v480
    %v489 = vmul.f32 %v465, %v481
    %v490 = vmul.f32 %v466, %v482
    %v491 = vmul.f32 %v467, %v483
    %v492 = vmul.f32 %v468, %v484
    %v493 = vmul.f32 %v469, %v485
    %v494 = vmul.f32 %v470, %v486
    %v495 = vmul.f32 %v392, %v487
    %v496 = vmul.f32 %v394, %v488
    %v497 = vmul.f32 %v396, %v489
    %v498 = vmul.f32 %v398, %v490
    %v499 = vmul.f32 %v400, %v491
    %v500 = vmul.f32 %v402, %v492
    %v501 = vmul.f32 %v404, %v493
    %v502 = vmul.f32 %v406, %v494
    %v503 = vsel %vm80, %v172, 0.0
    %504 = vadd.xlane.f32.xlu0 %v503
    %v505 = vpop.xlane.xlu0 %504
    %v506 = vsel %vm80, %v177, 0.0
    %507 = vadd.xlane.f32.xlu0 %v506
    %v508 = vpop.xlane.xlu0 %507
    %v509 = vsel %vm80, %v182, 0.0
    %510 = vadd.xlane.f32.xlu0 %v509
    %v511 = vpop.xlane.xlu0 %510
    %v512 = vsel %vm80, %v187, 0.0
    %513 = vadd.xlane.f32.xlu0 %v512
    %v514 = vpop.xlane.xlu0 %513
    %v515 = vsel %vm80, %v192, 0.0
    %516 = vadd.xlane.f32.xlu0 %v515
    %v517 = vpop.xlane.xlu0 %516
    %v518 = vsel %vm80, %v197, 0.0
    %519 = vadd.xlane.f32.xlu0 %v518
    %v520 = vpop.xlane.xlu0 %519
    %v521 = vsel %vm80, %v202, 0.0
    %522 = vadd.xlane.f32.xlu0 %v521
    %v523 = vpop.xlane.xlu0 %522
    %v524 = vsel %vm80, %v207, 0.0
    %525 = vadd.xlane.f32.xlu0 %v524
    %v526 = vpop.xlane.xlu0 %525
    %v527 = vmul.f32 %v505, 0.03125
    %v528 = vmul.f32 %v508, 0.03125
    %v529 = vmul.f32 %v511, 0.03125
    %v530 = vmul.f32 %v514, 0.03125
    %v531 = vmul.f32 %v517, 0.03125
    %v532 = vmul.f32 %v520, 0.03125
    %v533 = vmul.f32 %v523, 0.03125
    %v534 = vmul.f32 %v526, 0.03125
    %v535 = vsel %vm80, %v61, 0.0
    %536 = vadd.xlane.f32.xlu0 %v535
    %v537 = vpop.xlane.xlu0 %536
    %v538 = vsel %vm80, %v62, 0.0
    %539 = vadd.xlane.f32.xlu0 %v538
    %v540 = vpop.xlane.xlu0 %539
    %v541 = vsel %vm80, %v63, 0.0
    %542 = vadd.xlane.f32.xlu0 %v541
    %v543 = vpop.xlane.xlu0 %542
    %v544 = vsel %vm80, %v64, 0.0
    %545 = vadd.xlane.f32.xlu0 %v544
    %v546 = vpop.xlane.xlu0 %545
    %v547 = vsel %vm80, %v65, 0.0
    %548 = vadd.xlane.f32.xlu0 %v547
    %v549 = vpop.xlane.xlu0 %548
    %v550 = vsel %vm80, %v66, 0.0
    %551 = vadd.xlane.f32.xlu0 %v550
    %v552 = vpop.xlane.xlu0 %551
    %v553 = vsel %vm80, %v67, 0.0
    %554 = vadd.xlane.f32.xlu0 %v553
    %v555 = vpop.xlane.xlu0 %554
    %v556 = vsel %vm80, %v68, 0.0
    %557 = vadd.xlane.f32.xlu0 %v556
    %v558 = vpop.xlane.xlu0 %557
    %v559 = vmul.f32 %v537, 0.03125
    %v560 = vmul.f32 %v540, 0.03125
    %v561 = vmul.f32 %v543, 0.03125
    %v562 = vmul.f32 %v546, 0.03125
    %v563 = vmul.f32 %v549, 0.03125
    %v564 = vmul.f32 %v552, 0.03125
    %v565 = vmul.f32 %v555, 0.03125
    %v566 = vmul.f32 %v558, 0.03125
    %v567 = vsub.f32 %v172, %v527
    %v568 = vsub.f32 %v177, %v528
    %v569 = vsub.f32 %v182, %v529
    %v570 = vsub.f32 %v187, %v530
    %v571 = vsub.f32 %v192, %v531
    %v572 = vsub.f32 %v197, %v532
    %v573 = vsub.f32 %v202, %v533
    %v574 = vsub.f32 %v207, %v534
    %v575 = vsub.f32 %v61, %v559
    %v576 = vsub.f32 %v62, %v560
    %v577 = vsub.f32 %v63, %v561
    %v578 = vsub.f32 %v64, %v562
    %v579 = vsub.f32 %v65, %v563
    %v580 = vsub.f32 %v66, %v564
    %v581 = vsub.f32 %v67, %v565
    %v582 = vsub.f32 %v68, %v566
    %v583 = vmul.f32 %v567, %v567
    %v584 = vmul.f32 %v568, %v568
    %v585 = vmul.f32 %v569, %v569
    %v586 = vmul.f32 %v570, %v570
    %v587 = vmul.f32 %v571, %v571
    %v588 = vmul.f32 %v572, %v572
    %v589 = vmul.f32 %v573, %v573
    %v590 = vmul.f32 %v574, %v574
    %v591 = vsel %vm80, %v583, 0.0
    %592 = vadd.xlane.f32.xlu0 %v591
    %v593 = vpop.xlane.xlu0 %592
    %v594 = vsel %vm80, %v584, 0.0
    %595 = vadd.xlane.f32.xlu0 %v594
    %v596 = vpop.xlane.xlu0 %595
    %v597 = vsel %vm80, %v585, 0.0
    %598 = vadd.xlane.f32.xlu0 %v597
    %v599 = vpop.xlane.xlu0 %598
    %v600 = vsel %vm80, %v586, 0.0
    %601 = vadd.xlane.f32.xlu0 %v600
    %v602 = vpop.xlane.xlu0 %601
    %v603 = vsel %vm80, %v587, 0.0
    %604 = vadd.xlane.f32.xlu0 %v603
    %v605 = vpop.xlane.xlu0 %604
    %v606 = vsel %vm80, %v588, 0.0
    %607 = vadd.xlane.f32.xlu0 %v606
    %v608 = vpop.xlane.xlu0 %607
    %v609 = vsel %vm80, %v589, 0.0
    %610 = vadd.xlane.f32.xlu0 %v609
    %v611 = vpop.xlane.xlu0 %610
    %v612 = vsel %vm80, %v590, 0.0
    %613 = vadd.xlane.f32.xlu0 %v612
    %v614 = vpop.xlane.xlu0 %613
    %v615 = vmul.f32 %v593, 0.03125
    %v616 = vmul.f32 %v596, 0.03125
    %v617 = vmul.f32 %v599, 0.03125
    %v618 = vmul.f32 %v602, 0.03125
    %v619 = vmul.f32 %v605, 0.03125
    %v620 = vmul.f32 %v608, 0.03125
    %v621 = vmul.f32 %v611, 0.03125
    %v622 = vmul.f32 %v614, 0.03125
    %v623 = vmul.f32 %v567, %v575
    %v624 = vmul.f32 %v568, %v576
    %v625 = vmul.f32 %v569, %v577
    %v626 = vmul.f32 %v570, %v578
    %v627 = vmul.f32 %v571, %v579
    %v628 = vmul.f32 %v572, %v580
    %v629 = vmul.f32 %v573, %v581
    %v630 = vmul.f32 %v574, %v582
    %v631 = vsel %vm80, %v623, 0.0
    %632 = vadd.xlane.f32.xlu0 %v631
    %v633 = vpop.xlane.xlu0 %632
    %v634 = vsel %vm80, %v624, 0.0
    %635 = vadd.xlane.f32.xlu0 %v634
    %v636 = vpop.xlane.xlu0 %635
    %v637 = vsel %vm80, %v625, 0.0
    %638 = vadd.xlane.f32.xlu0 %v637
    %v639 = vpop.xlane.xlu0 %638
    %v640 = vsel %vm80, %v626, 0.0
    %641 = vadd.xlane.f32.xlu0 %v640
    %v642 = vpop.xlane.xlu0 %641
    %v643 = vsel %vm80, %v627, 0.0
    %644 = vadd.xlane.f32.xlu0 %v643
    %v645 = vpop.xlane.xlu0 %644
    %v646 = vsel %vm80, %v628, 0.0
    %647 = vadd.xlane.f32.xlu0 %v646
    %v648 = vpop.xlane.xlu0 %647
    %v649 = vsel %vm80, %v629, 0.0
    %650 = vadd.xlane.f32.xlu0 %v649
    %v651 = vpop.xlane.xlu0 %650
    %v652 = vsel %vm80, %v630, 0.0
    %653 = vadd.xlane.f32.xlu0 %v652
    %v654 = vpop.xlane.xlu0 %653
    %v655 = vmul.f32 %v633, 0.03125
    %v656 = vmul.f32 %v636, 0.03125
    %v657 = vmul.f32 %v639, 0.03125
    %v658 = vmul.f32 %v642, 0.03125
    %v659 = vmul.f32 %v645, 0.03125
    %v660 = vmul.f32 %v648, 0.03125
    %v661 = vmul.f32 %v651, 0.03125
    %v662 = vmul.f32 %v654, 0.03125
    %v663 = vmul.f32 %v575, %v575
    %v664 = vmul.f32 %v576, %v576
    %v665 = vmul.f32 %v577, %v577
    %v666 = vmul.f32 %v578, %v578
    %v667 = vmul.f32 %v579, %v579
    %v668 = vmul.f32 %v580, %v580
    %v669 = vmul.f32 %v581, %v581
    %v670 = vmul.f32 %v582, %v582
    %v671 = vsel %vm80, %v663, 0.0
    %672 = vadd.xlane.f32.xlu0 %v671
    %v673 = vpop.xlane.xlu0 %672
    %v674 = vsel %vm80, %v664, 0.0
    %675 = vadd.xlane.f32.xlu0 %v674
    %v676 = vpop.xlane.xlu0 %675
    %v677 = vsel %vm80, %v665, 0.0
    %678 = vadd.xlane.f32.xlu0 %v677
    %v679 = vpop.xlane.xlu0 %678
    %v680 = vsel %vm80, %v666, 0.0
    %681 = vadd.xlane.f32.xlu0 %v680
    %v682 = vpop.xlane.xlu0 %681
    %v683 = vsel %vm80, %v667, 0.0
    %684 = vadd.xlane.f32.xlu0 %v683
    %v685 = vpop.xlane.xlu0 %684
    %v686 = vsel %vm80, %v668, 0.0
    %687 = vadd.xlane.f32.xlu0 %v686
    %v688 = vpop.xlane.xlu0 %687
    %v689 = vsel %vm80, %v669, 0.0
    %690 = vadd.xlane.f32.xlu0 %v689
    %v691 = vpop.xlane.xlu0 %690
    %v692 = vsel %vm80, %v670, 0.0
    %693 = vadd.xlane.f32.xlu0 %v692
    %v694 = vpop.xlane.xlu0 %693
    %v695 = vmul.f32 %v673, 0.03125
    %v696 = vmul.f32 %v676, 0.03125
    %v697 = vmul.f32 %v679, 0.03125
    %v698 = vmul.f32 %v682, 0.03125
    %v699 = vmul.f32 %v685, 0.03125
    %v700 = vmul.f32 %v688, 0.03125
    %v701 = vmul.f32 %v691, 0.03125
    %v702 = vmul.f32 %v694, 0.03125
    %v703 = vmul.f32 %v495, %v495
    %v704 = vmul.f32 %v496, %v496
    %v705 = vmul.f32 %v497, %v497
    %v706 = vmul.f32 %v498, %v498
    %v707 = vmul.f32 %v499, %v499
    %v708 = vmul.f32 %v500, %v500
    %v709 = vmul.f32 %v501, %v501
    %v710 = vmul.f32 %v502, %v502
    %v711 = vmul.f32 %v703, %v615
    %v712 = vmul.f32 %v704, %v616
    %v713 = vmul.f32 %v705, %v617
    %v714 = vmul.f32 %v706, %v618
    %v715 = vmul.f32 %v707, %v619
    %v716 = vmul.f32 %v708, %v620
    %v717 = vmul.f32 %v709, %v621
    %v718 = vmul.f32 %v710, %v622
    %v719 = vmul.f32 %v495, 2.0
    %v720 = vmul.f32 %v496, 2.0
    %v721 = vmul.f32 %v497, 2.0
    %v722 = vmul.f32 %v498, 2.0
    %v723 = vmul.f32 %v499, 2.0
    %v724 = vmul.f32 %v500, 2.0
    %v725 = vmul.f32 %v501, 2.0
    %v726 = vmul.f32 %v502, 2.0
    %v727 = vmul.f32 %v719, %v655
    %v728 = vmul.f32 %v720, %v656
    %v729 = vmul.f32 %v721, %v657
    %v730 = vmul.f32 %v722, %v658
    %v731 = vmul.f32 %v723, %v659
    %v732 = vmul.f32 %v724, %v660
    %v733 = vmul.f32 %v725, %v661
    %v734 = vmul.f32 %v726, %v662
    %v735 = vadd.f32 %v711, %v727
    %v736 = vadd.f32 %v712, %v728
    %v737 = vadd.f32 %v713, %v729
    %v738 = vadd.f32 %v714, %v730
    %v739 = vadd.f32 %v715, %v731
    %v740 = vadd.f32 %v716, %v732
    %v741 = vadd.f32 %v717, %v733
    %v742 = vadd.f32 %v718, %v734
    %v743 = vadd.f32 %v735, %v695
    %v744 = vadd.f32 %v736, %v696
    %v745 = vadd.f32 %v737, %v697
    %v746 = vadd.f32 %v738, %v698
    %v747 = vadd.f32 %v739, %v699
    %v748 = vadd.f32 %v740, %v700
    %v749 = vadd.f32 %v741, %v701
    %v750 = vadd.f32 %v742, %v702
    %v751 = vmax.f32 %v743, 0.0
    %v752 = vmax.f32 %v744, 0.0
    %v753 = vmax.f32 %v745, 0.0
    %v754 = vmax.f32 %v746, 0.0
    %v755 = vmax.f32 %v747, 0.0
    %v756 = vmax.f32 %v748, 0.0
    %v757 = vmax.f32 %v749, 0.0
    %v758 = vmax.f32 %v750, 0.0
    %v759 = vadd.f32 %v751, 1e-05
    %v760 = vadd.f32 %v752, 1e-05
    %v761 = vadd.f32 %v753, 1e-05
    %v762 = vadd.f32 %v754, 1e-05
    %v763 = vadd.f32 %v755, 1e-05
    %v764 = vadd.f32 %v756, 1e-05
    %v765 = vadd.f32 %v757, 1e-05
    %v766 = vadd.f32 %v758, 1e-05
    %v767 = vrsqrt.pop %v759
    %v768 = vrsqrt.pop %v760
    %v769 = vrsqrt.pop %v761
    %v770 = vrsqrt.pop %v762
    %v771 = vrsqrt.pop %v763
    %v772 = vrsqrt.pop %v764
    %v773 = vrsqrt.pop %v765
    %v774 = vrsqrt.pop %v766
    %v775 = vld [vmem:[%s5] sm:$0xf]
    %v776 = vld [vmem:[#allocation5] sm:$0xff]
    %v777 = vld [vmem:[#allocation5 + $0x8] sm:$0xff]
    %v778 = vld [vmem:[#allocation5 + $0x10] sm:$0xff]
    %v779 = vld [vmem:[#allocation5 + $0x18] sm:$0xff]
    %v781 = vsel %vm326, %v495, 0
    %v784 = vsel %vm326, %v496, 0
    %v787 = vsel %vm326, %v497, 0
    %v790 = vsel %vm326, %v498, 0
    %v793 = vsel %vm326, %v499, 0
    %v796 = vsel %vm326, %v500, 0
    %v799 = vsel %vm326, %v501, 0
    %v802 = vsel %vm326, %v502, 0
    %vm804 = vcmask 1043456
    %v806 = vsel %vm804, %v775, 0
    %808 = vmatprep.subr.mxu0 0.0
    %809 = vmatpush1.msra.mxu0 0.0
    %810 = vmatprep.subr.mxu0 0.0
    %811 = vmatpush1.msra.mxu0 0.0
    %812 = vmatprep.subr.mxu0 0.0
    %813 = vmatpush1.msra.mxu0 0.0
    %814 = vmatprep.subr.mxu0 0.0
    %815 = vmatpush1.msra.mxu0 0.0
    %816 = vmatprep.subr.mxu0 0.0
    %817 = vmatpush1.msra.mxu0 0.0
    %818 = vmatprep.subr.mxu0 0.0
    %819 = vmatpush1.msra.mxu0 0.0
    %820 = vmatprep.subr.mxu0 0.0
    %821 = vmatpush1.msra.mxu0 0.0
    %822 = vmatprep.subr.mxu0 0.0
    %823 = vmatpush1.msra.mxu0 0.0
    %824 = vmatprep.subr.mxu0 0.0
    %825 = vmatpush1.msra.mxu0 0.0
    %826 = vmatprep.subr.mxu0 0.0
    %827 = vmatpush1.msra.mxu0 0.0
    %828 = vmatprep.subr.mxu0 0.0
    %829 = vmatpush1.msra.mxu0 0.0
    %830 = vmatprep.subr.mxu0 0.0
    %831 = vmatpush1.msra.mxu0 0.0
    %832 = vmatprep.subr.mxu0 0.0
    %833 = vmatpush1.msra.mxu0 0.0
    %834 = vmatprep.subr.mxu0 0.0
    %835 = vmatpush1.msra.mxu0 0.0
    %836 = vmatprep.subr.mxu0 0.0
    %837 = vmatpush1.msra.mxu0 0.0
    %838 = vmatprep.subr.mxu0 0.0
    %839 = vmatpush1.msra.mxu0 %v806
    %840 = vmatprep.subr.mxu0 0.0
    %841 = vmatpush2.msra.mxu0 0.0
    %842 = vmatprep.subr.mxu0 0.0
    %843 = vmatpush2.msra.mxu0 0.0
    %844 = vmatprep.subr.mxu0 0.0
    %845 = vmatpush2.msra.mxu0 0.0
    %846 = vmatprep.subr.mxu0 0.0
    %847 = vmatpush2.msra.mxu0 0.0
    %848 = vmatprep.subr.mxu0 0.0
    %849 = vmatpush2.msra.mxu0 0.0
    %850 = vmatprep.subr.mxu0 0.0
    %851 = vmatpush2.msra.mxu0 0.0
    %852 = vmatprep.subr.mxu0 0.0
    %853 = vmatpush2.msra.mxu0 0.0
    %854 = vmatprep.subr.mxu0 0.0
    %855 = vmatpush2.msra.mxu0 0.0
    %856 = vmatprep.subr.mxu0 0.0
    %857 = vmatpush2.msra.mxu0 0.0
    %858 = vmatprep.subr.mxu0 0.0
    %859 = vmatpush2.msra.mxu0 0.0
    %860 = vmatprep.subr.mxu0 0.0
    %861 = vmatpush2.msra.mxu0 0.0
    %862 = vmatprep.subr.mxu0 0.0
    %863 = vmatpush2.msra.mxu0 0.0
    %864 = vmatprep.subr.mxu0 0.0
    %865 = vmatpush2.msra.mxu0 0.0
    %866 = vmatprep.subr.mxu0 0.0
    %867 = vmatpush2.msra.mxu0 0.0
    %868 = vmatprep.subr.mxu0 0.0
    %869 = vmatpush2.msra.mxu0 0.0
    %870 = vmatprep.subr.mxu0 0.0
    %871 = vmatpush2.msra.mxu0 0.0
    %872 = vmatprep.mubr.f32.mxu0 0.0
    %873 = vmatmul.mubr.f32.gmra.mxu0 %v781
    %v874 = vpop.f32.mrf.mxu0
    %v875 = vadd.f32 0.0, %v874
    %v876 = vpop.f32.mrf.mxu0
    %877 = vmatprep.mubr.f32.mxu0 0.0
    %878 = vmatmul.mubr.f32.gmra.mxu0 %v784
    %v879 = vpop.f32.mrf.mxu0
    %v880 = vadd.f32 0.0, %v879
    %v881 = vpop.f32.mrf.mxu0
    %882 = vmatprep.mubr.f32.mxu0 0.0
    %883 = vmatmul.mubr.f32.gmra.mxu0 %v787
    %v884 = vpop.f32.mrf.mxu0
    %v885 = vadd.f32 0.0, %v884
    %v886 = vpop.f32.mrf.mxu0
    %887 = vmatprep.mubr.f32.mxu0 0.0
    %888 = vmatmul.mubr.f32.gmra.mxu0 %v790
    %v889 = vpop.f32.mrf.mxu0
    %v890 = vadd.f32 0.0, %v889
    %v891 = vpop.f32.mrf.mxu0
    %892 = vmatprep.mubr.f32.mxu0 0.0
    %893 = vmatmul.mubr.f32.gmra.mxu0 %v793
    %v894 = vpop.f32.mrf.mxu0
    %v895 = vadd.f32 0.0, %v894
    %v896 = vpop.f32.mrf.mxu0
    %897 = vmatprep.mubr.f32.mxu0 0.0
    %898 = vmatmul.mubr.f32.gmra.mxu0 %v796
    %v899 = vpop.f32.mrf.mxu0
    %v900 = vadd.f32 0.0, %v899
    %v901 = vpop.f32.mrf.mxu0
    %902 = vmatprep.mubr.f32.mxu0 0.0
    %903 = vmatmul.mubr.f32.gmra.mxu0 %v799
    %v904 = vpop.f32.mrf.mxu0
    %v905 = vadd.f32 0.0, %v904
    %v906 = vpop.f32.mrf.mxu0
    %907 = vmatprep.mubr.f32.mxu0 0.0
    %908 = vmatmul.mubr.f32.gmra.mxu0 %v802
    %v909 = vpop.f32.mrf.mxu0
    %v910 = vadd.f32 0.0, %v909
    %v911 = vpop.f32.mrf.mxu0
    %912 = vdwg.mxu0
    %v914 = vsel %vm326, %v767, 0
    %v917 = vsel %vm326, %v768, 0
    %v920 = vsel %vm326, %v769, 0
    %v923 = vsel %vm326, %v770, 0
    %v926 = vsel %vm326, %v771, 0
    %v929 = vsel %vm326, %v772, 0
    %v932 = vsel %vm326, %v773, 0
    %v935 = vsel %vm326, %v774, 0
    %937 = vmatprep.subr.mxu0 0.0
    %938 = vmatpush1.msra.mxu0 0.0
    %939 = vmatprep.subr.mxu0 0.0
    %940 = vmatpush1.msra.mxu0 0.0
    %941 = vmatprep.subr.mxu0 0.0
    %942 = vmatpush1.msra.mxu0 0.0
    %943 = vmatprep.subr.mxu0 0.0
    %944 = vmatpush1.msra.mxu0 0.0
    %945 = vmatprep.subr.mxu0 0.0
    %946 = vmatpush1.msra.mxu0 0.0
    %947 = vmatprep.subr.mxu0 0.0
    %948 = vmatpush1.msra.mxu0 0.0
    %949 = vmatprep.subr.mxu0 0.0
    %950 = vmatpush1.msra.mxu0 0.0
    %951 = vmatprep.subr.mxu0 0.0
    %952 = vmatpush1.msra.mxu0 0.0
    %953 = vmatprep.subr.mxu0 0.0
    %954 = vmatpush1.msra.mxu0 0.0
    %955 = vmatprep.subr.mxu0 0.0
    %956 = vmatpush1.msra.mxu0 0.0
    %957 = vmatprep.subr.mxu0 0.0
    %958 = vmatpush1.msra.mxu0 0.0
    %959 = vmatprep.subr.mxu0 0.0
    %960 = vmatpush1.msra.mxu0 0.0
    %961 = vmatprep.subr.mxu0 0.0
    %962 = vmatpush1.msra.mxu0 0.0
    %963 = vmatprep.subr.mxu0 0.0
    %964 = vmatpush1.msra.mxu0 0.0
    %965 = vmatprep.subr.mxu0 0.0
    %966 = vmatpush1.msra.mxu0 0.0
    %967 = vmatprep.subr.mxu0 0.0
    %968 = vmatpush1.msra.mxu0 %v806
    %969 = vmatprep.subr.mxu0 0.0
    %970 = vmatpush2.msra.mxu0 0.0
    %971 = vmatprep.subr.mxu0 0.0
    %972 = vmatpush2.msra.mxu0 0.0
    %973 = vmatprep.subr.mxu0 0.0
    %974 = vmatpush2.msra.mxu0 0.0
    %975 = vmatprep.subr.mxu0 0.0
    %976 = vmatpush2.msra.mxu0 0.0
    %977 = vmatprep.subr.mxu0 0.0
    %978 = vmatpush2.msra.mxu0 0.0
    %979 = vmatprep.subr.mxu0 0.0
    %980 = vmatpush2.msra.mxu0 0.0
    %981 = vmatprep.subr.mxu0 0.0
    %982 = vmatpush2.msra.mxu0 0.0
    %983 = vmatprep.subr.mxu0 0.0
    %984 = vmatpush2.msra.mxu0 0.0
    %985 = vmatprep.subr.mxu0 0.0
    %986 = vmatpush2.msra.mxu0 0.0
    %987 = vmatprep.subr.mxu0 0.0
    %988 = vmatpush2.msra.mxu0 0.0
    %989 = vmatprep.subr.mxu0 0.0
    %990 = vmatpush2.msra.mxu0 0.0
    %991 = vmatprep.subr.mxu0 0.0
    %992 = vmatpush2.msra.mxu0 0.0
    %993 = vmatprep.subr.mxu0 0.0
    %994 = vmatpush2.msra.mxu0 0.0
    %995 = vmatprep.subr.mxu0 0.0
    %996 = vmatpush2.msra.mxu0 0.0
    %997 = vmatprep.subr.mxu0 0.0
    %998 = vmatpush2.msra.mxu0 0.0
    %999 = vmatprep.subr.mxu0 0.0
    %1000 = vmatpush2.msra.mxu0 0.0
    %1001 = vmatprep.mubr.f32.mxu0 0.0
    %1002 = vmatmul.mubr.f32.gmra.mxu0 %v914
    %v1003 = vpop.f32.mrf.mxu0
    %v1004 = vadd.f32 0.0, %v1003
    %v1005 = vpop.f32.mrf.mxu0
    %1006 = vmatprep.mubr.f32.mxu0 0.0
    %1007 = vmatmul.mubr.f32.gmra.mxu0 %v917
    %v1008 = vpop.f32.mrf.mxu0
    %v1009 = vadd.f32 0.0, %v1008
    %v1010 = vpop.f32.mrf.mxu0
    %1011 = vmatprep.mubr.f32.mxu0 0.0
    %1012 = vmatmul.mubr.f32.gmra.mxu0 %v920
    %v1013 = vpop.f32.mrf.mxu0
    %v1014 = vadd.f32 0.0, %v1013
    %v1015 = vpop.f32.mrf.mxu0
    %1016 = vmatprep.mubr.f32.mxu0 0.0
    %1017 = vmatmul.mubr.f32.gmra.mxu0 %v923
    %v1018 = vpop.f32.mrf.mxu0
    %v1019 = vadd.f32 0.0, %v1018
    %v1020 = vpop.f32.mrf.mxu0
    %1021 = vmatprep.mubr.f32.mxu0 0.0
    %1022 = vmatmul.mubr.f32.gmra.mxu0 %v926
    %v1023 = vpop.f32.mrf.mxu0
    %v1024 = vadd.f32 0.0, %v1023
    %v1025 = vpop.f32.mrf.mxu0
    %1026 = vmatprep.mubr.f32.mxu0 0.0
    %1027 = vmatmul.mubr.f32.gmra.mxu0 %v929
    %v1028 = vpop.f32.mrf.mxu0
    %v1029 = vadd.f32 0.0, %v1028
    %v1030 = vpop.f32.mrf.mxu0
    %1031 = vmatprep.mubr.f32.mxu0 0.0
    %1032 = vmatmul.mubr.f32.gmra.mxu0 %v932
    %v1033 = vpop.f32.mrf.mxu0
    %v1034 = vadd.f32 0.0, %v1033
    %v1035 = vpop.f32.mrf.mxu0
    %1036 = vmatprep.mubr.f32.mxu0 0.0
    %1037 = vmatmul.mubr.f32.gmra.mxu0 %v935
    %v1038 = vpop.f32.mrf.mxu0
    %v1039 = vadd.f32 0.0, %v1038
    %v1040 = vpop.f32.mrf.mxu0
    %1041 = vdwg.mxu0
    %v1043 = vsel %vm80, %v567, 0
    %v1046 = vsel %vm80, %v568, 0
    %v1049 = vsel %vm80, %v569, 0
    %v1052 = vsel %vm80, %v570, 0
    %v1055 = vsel %vm80, %v571, 0
    %v1058 = vsel %vm80, %v572, 0
    %v1061 = vsel %vm80, %v573, 0
    %v1064 = vsel %vm80, %v574, 0
    %1066 = vmatprep.subr.mxu0 0.0
    %1067 = vmatpush1.msra.mxu0 0.0
    %1068 = vmatprep.subr.mxu0 0.0
    %1069 = vmatpush1.msra.mxu0 0.0
    %1070 = vmatprep.subr.mxu0 0.0
    %1071 = vmatpush1.msra.mxu0 0.0
    %1072 = vmatprep.subr.mxu0 0.0
    %1073 = vmatpush1.msra.mxu0 0.0
    %1074 = vmatprep.subr.mxu0 0.0
    %1075 = vmatpush1.msra.mxu0 0.0
    %1076 = vmatprep.subr.mxu0 0.0
    %1077 = vmatpush1.msra.mxu0 0.0
    %1078 = vmatprep.subr.mxu0 0.0
    %1079 = vmatpush1.msra.mxu0 0.0
    %1080 = vmatprep.subr.mxu0 0.0
    %1081 = vmatpush1.msra.mxu0 0.0
    %1082 = vmatprep.subr.mxu0 0.0
    %1083 = vmatpush1.msra.mxu0 0.0
    %1084 = vmatprep.subr.mxu0 0.0
    %1085 = vmatpush1.msra.mxu0 0.0
    %1086 = vmatprep.subr.mxu0 0.0
    %1087 = vmatpush1.msra.mxu0 0.0
    %1088 = vmatprep.subr.mxu0 0.0
    %1089 = vmatpush1.msra.mxu0 0.0
    %1090 = vmatprep.subr.mxu0 0.0
    %1091 = vmatpush1.msra.mxu0 %v779
    %1092 = vmatprep.subr.mxu0 0.0
    %1093 = vmatpush1.msra.mxu0 %v778
    %1094 = vmatprep.subr.mxu0 0.0
    %1095 = vmatpush1.msra.mxu0 %v777
    %1096 = vmatprep.subr.mxu0 0.0
    %1097 = vmatpush1.msra.mxu0 %v776
    %1098 = vmatprep.subr.mxu0 0.0
    %1099 = vmatpush2.msra.mxu0 0.0
    %1100 = vmatprep.subr.mxu0 0.0
    %1101 = vmatpush2.msra.mxu0 0.0
    %1102 = vmatprep.subr.mxu0 0.0
    %1103 = vmatpush2.msra.mxu0 0.0
    %1104 = vmatprep.subr.mxu0 0.0
    %1105 = vmatpush2.msra.mxu0 0.0
    %1106 = vmatprep.subr.mxu0 0.0
    %1107 = vmatpush2.msra.mxu0 0.0
    %1108 = vmatprep.subr.mxu0 0.0
    %1109 = vmatpush2.msra.mxu0 0.0
    %1110 = vmatprep.subr.mxu0 0.0
    %1111 = vmatpush2.msra.mxu0 0.0
    %1112 = vmatprep.subr.mxu0 0.0
    %1113 = vmatpush2.msra.mxu0 0.0
    %1114 = vmatprep.subr.mxu0 0.0
    %1115 = vmatpush2.msra.mxu0 0.0
    %1116 = vmatprep.subr.mxu0 0.0
    %1117 = vmatpush2.msra.mxu0 0.0
    %1118 = vmatprep.subr.mxu0 0.0
    %1119 = vmatpush2.msra.mxu0 0.0
    %1120 = vmatprep.subr.mxu0 0.0
    %1121 = vmatpush2.msra.mxu0 0.0
    %1122 = vmatprep.subr.mxu0 0.0
    %1123 = vmatpush2.msra.mxu0 0.0
    %1124 = vmatprep.subr.mxu0 0.0
    %1125 = vmatpush2.msra.mxu0 0.0
    %1126 = vmatprep.subr.mxu0 0.0
    %1127 = vmatpush2.msra.mxu0 0.0
    %1128 = vmatprep.subr.mxu0 0.0
    %1129 = vmatpush2.msra.mxu0 0.0
    %1130 = vmatprep.mubr.f32.mxu0 0.0
    %1131 = vmatmul.mubr.f32.gmra.mxu0 %v1043
    %v1132 = vpop.f32.mrf.mxu0
    %v1133 = vadd.f32 0.0, %v1132
    %v1134 = vpop.f32.mrf.mxu0
    %1135 = vmatprep.mubr.f32.mxu0 0.0
    %1136 = vmatmul.mubr.f32.gmra.mxu0 %v1046
    %v1137 = vpop.f32.mrf.mxu0
    %v1138 = vadd.f32 0.0, %v1137
    %v1139 = vpop.f32.mrf.mxu0
    %1140 = vmatprep.mubr.f32.mxu0 0.0
    %1141 = vmatmul.mubr.f32.gmra.mxu0 %v1049
    %v1142 = vpop.f32.mrf.mxu0
    %v1143 = vadd.f32 0.0, %v1142
    %v1144 = vpop.f32.mrf.mxu0
    %1145 = vmatprep.mubr.f32.mxu0 0.0
    %1146 = vmatmul.mubr.f32.gmra.mxu0 %v1052
    %v1147 = vpop.f32.mrf.mxu0
    %v1148 = vadd.f32 0.0, %v1147
    %v1149 = vpop.f32.mrf.mxu0
    %1150 = vmatprep.mubr.f32.mxu0 0.0
    %1151 = vmatmul.mubr.f32.gmra.mxu0 %v1055
    %v1152 = vpop.f32.mrf.mxu0
    %v1153 = vadd.f32 0.0, %v1152
    %v1154 = vpop.f32.mrf.mxu0
    %1155 = vmatprep.mubr.f32.mxu0 0.0
    %1156 = vmatmul.mubr.f32.gmra.mxu0 %v1058
    %v1157 = vpop.f32.mrf.mxu0
    %v1158 = vadd.f32 0.0, %v1157
    %v1159 = vpop.f32.mrf.mxu0
    %1160 = vmatprep.mubr.f32.mxu0 0.0
    %1161 = vmatmul.mubr.f32.gmra.mxu0 %v1061
    %v1162 = vpop.f32.mrf.mxu0
    %v1163 = vadd.f32 0.0, %v1162
    %v1164 = vpop.f32.mrf.mxu0
    %1165 = vmatprep.mubr.f32.mxu0 0.0
    %1166 = vmatmul.mubr.f32.gmra.mxu0 %v1064
    %v1167 = vpop.f32.mrf.mxu0
    %v1168 = vadd.f32 0.0, %v1167
    %v1169 = vpop.f32.mrf.mxu0
    %1170 = vdwg.mxu0
    %v1172 = vsel %vm80, %v575, 0
    %v1175 = vsel %vm80, %v576, 0
    %v1178 = vsel %vm80, %v577, 0
    %v1181 = vsel %vm80, %v578, 0
    %v1184 = vsel %vm80, %v579, 0
    %v1187 = vsel %vm80, %v580, 0
    %v1190 = vsel %vm80, %v581, 0
    %v1193 = vsel %vm80, %v582, 0
    %1195 = vmatprep.subr.mxu0 0.0
    %1196 = vmatpush1.msra.mxu0 0.0
    %1197 = vmatprep.subr.mxu0 0.0
    %1198 = vmatpush1.msra.mxu0 0.0
    %1199 = vmatprep.subr.mxu0 0.0
    %1200 = vmatpush1.msra.mxu0 0.0
    %1201 = vmatprep.subr.mxu0 0.0
    %1202 = vmatpush1.msra.mxu0 0.0
    %1203 = vmatprep.subr.mxu0 0.0
    %1204 = vmatpush1.msra.mxu0 0.0
    %1205 = vmatprep.subr.mxu0 0.0
    %1206 = vmatpush1.msra.mxu0 0.0
    %1207 = vmatprep.subr.mxu0 0.0
    %1208 = vmatpush1.msra.mxu0 0.0
    %1209 = vmatprep.subr.mxu0 0.0
    %1210 = vmatpush1.msra.mxu0 0.0
    %1211 = vmatprep.subr.mxu0 0.0
    %1212 = vmatpush1.msra.mxu0 0.0
    %1213 = vmatprep.subr.mxu0 0.0
    %1214 = vmatpush1.msra.mxu0 0.0
    %1215 = vmatprep.subr.mxu0 0.0
    %1216 = vmatpush1.msra.mxu0 0.0
    %1217 = vmatprep.subr.mxu0 0.0
    %1218 = vmatpush1.msra.mxu0 0.0
    %1219 = vmatprep.subr.mxu0 0.0
    %1220 = vmatpush1.msra.mxu0 %v779
    %1221 = vmatprep.subr.mxu0 0.0
    %1222 = vmatpush1.msra.mxu0 %v778
    %1223 = vmatprep.subr.mxu0 0.0
    %1224 = vmatpush1.msra.mxu0 %v777
    %1225 = vmatprep.subr.mxu0 0.0
    %1226 = vmatpush1.msra.mxu0 %v776
    %1227 = vmatprep.subr.mxu0 0.0
    %1228 = vmatpush2.msra.mxu0 0.0
    %1229 = vmatprep.subr.mxu0 0.0
    %1230 = vmatpush2.msra.mxu0 0.0
    %1231 = vmatprep.subr.mxu0 0.0
    %1232 = vmatpush2.msra.mxu0 0.0
    %1233 = vmatprep.subr.mxu0 0.0
    %1234 = vmatpush2.msra.mxu0 0.0
    %1235 = vmatprep.subr.mxu0 0.0
    %1236 = vmatpush2.msra.mxu0 0.0
    %1237 = vmatprep.subr.mxu0 0.0
    %1238 = vmatpush2.msra.mxu0 0.0
    %1239 = vmatprep.subr.mxu0 0.0
    %1240 = vmatpush2.msra.mxu0 0.0
    %1241 = vmatprep.subr.mxu0 0.0
    %1242 = vmatpush2.msra.mxu0 0.0
    %1243 = vmatprep.subr.mxu0 0.0
    %1244 = vmatpush2.msra.mxu0 0.0
    %1245 = vmatprep.subr.mxu0 0.0
    %1246 = vmatpush2.msra.mxu0 0.0
    %1247 = vmatprep.subr.mxu0 0.0
    %1248 = vmatpush2.msra.mxu0 0.0
    %1249 = vmatprep.subr.mxu0 0.0
    %1250 = vmatpush2.msra.mxu0 0.0
    %1251 = vmatprep.subr.mxu0 0.0
    %1252 = vmatpush2.msra.mxu0 0.0
    %1253 = vmatprep.subr.mxu0 0.0
    %1254 = vmatpush2.msra.mxu0 0.0
    %1255 = vmatprep.subr.mxu0 0.0
    %1256 = vmatpush2.msra.mxu0 0.0
    %1257 = vmatprep.subr.mxu0 0.0
    %1258 = vmatpush2.msra.mxu0 0.0
    %1259 = vmatprep.mubr.f32.mxu0 0.0
    %1260 = vmatmul.mubr.f32.gmra.mxu0 %v1172
    %v1261 = vpop.f32.mrf.mxu0
    %v1262 = vadd.f32 0.0, %v1261
    %v1263 = vpop.f32.mrf.mxu0
    %1264 = vmatprep.mubr.f32.mxu0 0.0
    %1265 = vmatmul.mubr.f32.gmra.mxu0 %v1175
    %v1266 = vpop.f32.mrf.mxu0
    %v1267 = vadd.f32 0.0, %v1266
    %v1268 = vpop.f32.mrf.mxu0
    %1269 = vmatprep.mubr.f32.mxu0 0.0
    %1270 = vmatmul.mubr.f32.gmra.mxu0 %v1178
    %v1271 = vpop.f32.mrf.mxu0
    %v1272 = vadd.f32 0.0, %v1271
    %v1273 = vpop.f32.mrf.mxu0
    %1274 = vmatprep.mubr.f32.mxu0 0.0
    %1275 = vmatmul.mubr.f32.gmra.mxu0 %v1181
    %v1276 = vpop.f32.mrf.mxu0
    %v1277 = vadd.f32 0.0, %v1276
    %v1278 = vpop.f32.mrf.mxu0
    %1279 = vmatprep.mubr.f32.mxu0 0.0
    %1280 = vmatmul.mubr.f32.gmra.mxu0 %v1184
    %v1281 = vpop.f32.mrf.mxu0
    %v1282 = vadd.f32 0.0, %v1281
    %v1283 = vpop.f32.mrf.mxu0
    %1284 = vmatprep.mubr.f32.mxu0 0.0
    %1285 = vmatmul.mubr.f32.gmra.mxu0 %v1187
    %v1286 = vpop.f32.mrf.mxu0
    %v1287 = vadd.f32 0.0, %v1286
    %v1288 = vpop.f32.mrf.mxu0
    %1289 = vmatprep.mubr.f32.mxu0 0.0
    %1290 = vmatmul.mubr.f32.gmra.mxu0 %v1190
    %v1291 = vpop.f32.mrf.mxu0
    %v1292 = vadd.f32 0.0, %v1291
    %v1293 = vpop.f32.mrf.mxu0
    %1294 = vmatprep.mubr.f32.mxu0 0.0
    %1295 = vmatmul.mubr.f32.gmra.mxu0 %v1193
    %v1296 = vpop.f32.mrf.mxu0
    %v1297 = vadd.f32 0.0, %v1296
    %v1298 = vpop.f32.mrf.mxu0
    %1299 = vdwg.mxu0
    %v1300 = vmul.f32 %v875, %v1133
    %v1301 = vmul.f32 %v880, %v1138
    %v1302 = vmul.f32 %v885, %v1143
    %v1303 = vmul.f32 %v890, %v1148
    %v1304 = vmul.f32 %v895, %v1153
    %v1305 = vmul.f32 %v900, %v1158
    %v1306 = vmul.f32 %v905, %v1163
    %v1307 = vmul.f32 %v910, %v1168
    %v1308 = vadd.f32 %v1300, %v1262
    %v1309 = vadd.f32 %v1301, %v1267
    %v1310 = vadd.f32 %v1302, %v1272
    %v1311 = vadd.f32 %v1303, %v1277
    %v1312 = vadd.f32 %v1304, %v1282
    %v1313 = vadd.f32 %v1305, %v1287
    %v1314 = vadd.f32 %v1306, %v1292
    %v1315 = vadd.f32 %v1307, %v1297
    %v1316 = vmul.f32 %v1308, %v1004
    %v1317 = vmul.f32 %v1309, %v1009
    %v1318 = vmul.f32 %v1310, %v1014
    %v1319 = vmul.f32 %v1311, %v1019
    %v1320 = vmul.f32 %v1312, %v1024
    %v1321 = vmul.f32 %v1313, %v1029
    %v1322 = vmul.f32 %v1314, %v1034
    %v1323 = vmul.f32 %v1315, %v1039
    %v1324 = vld [vmem:[%s7] sm:$0x1]
    %v1326 = vlaneseq
    %v1327 = vshrl.u32 %v1326, 7
    %v1328 = vsub.s32 0, %v1327
    %v1329 = vrot.slane %v1324, %v1328
    %v1331 = vmul.f32 %v1316, %v1329
    %v1332 = vmul.f32 %v1317, %v1329
    %v1333 = vmul.f32 %v1318, %v1329
    %v1334 = vmul.f32 %v1319, %v1329
    %v1335 = vmul.f32 %v1320, %v1329
    %v1336 = vmul.f32 %v1321, %v1329
    %v1337 = vmul.f32 %v1322, %v1329
    %v1338 = vmul.f32 %v1323, %v1329
    %v1339 = vld [vmem:[%s8] sm:$0x1]
    %v1341 = vlaneseq
    %v1342 = vshrl.u32 %v1341, 7
    %v1343 = vsub.s32 0, %v1342
    %v1344 = vrot.slane %v1339, %v1343
    %v1346 = vadd.f32 %v1331, %v1344
    %v1347 = vadd.f32 %v1332, %v1344
    %v1348 = vadd.f32 %v1333, %v1344
    %v1349 = vadd.f32 %v1334, %v1344
    %v1350 = vadd.f32 %v1335, %v1344
    %v1351 = vadd.f32 %v1336, %v1344
    %v1352 = vadd.f32 %v1337, %v1344
    %v1353 = vadd.f32 %v1338, %v1344
    %1354 = vst [vmem:[#allocation7] sm:$0xff] %v1346
    %1355 = vst [vmem:[#allocation7 + $0x8] sm:$0xff] %v1347
    %1356 = vst [vmem:[#allocation7 + $0x10] sm:$0xff] %v1348
    %1357 = vst [vmem:[#allocation7 + $0x18] sm:$0xff] %v1349
    %1358 = vst [vmem:[#allocation7 + $0x20] sm:$0xff] %v1350
    %1359 = vst [vmem:[#allocation7 + $0x28] sm:$0xff] %v1351
    %1360 = vst [vmem:[#allocation7 + $0x30] sm:$0xff] %v1352
    %1361 = vst [vmem:[#allocation7 + $0x38] sm:$0xff] %v1353
    // Predicated region
    $region46: #{tpu_custom_call.1} parent=1 // pred_check
      _
    $region47: #{tpu_custom_call.1} parent=1 // pred_check_branch
      %1363 = sbr.rel (0) target = $region49
    $region48: #{tpu_custom_call.1} parent=1 // pred_region
      %s1365 = ssub.s32 1024, 1024
      %1366 = vsyncadd [#allocation4], %s1365
      %s1367 = sshll.u32 [#allocation7], 4
      %s1368 = int_to_ptr.vmem [resolvable:$true] %s1367
      %1373 = dma.vmem_to_hbm [thread:$0]  %s1368, 1024, %s9, [#allocation4], 128, 128, 8
    $region49: #{tpu_custom_call.1} parent=1 // pred_fallthru
      _
    // Predicated region
    $region50: #{tpu_custom_call.1} parent=1 // pred_check
      _
    $region51: #{tpu_custom_call.1} parent=1 // pred_check_branch
      %1375 = sbr.rel (0) target = $region53
    $region52: #{tpu_custom_call.1} parent=1 // pred_region
      %1376 = dma.done [#allocation4], 1024
    $region53: #{tpu_custom_call.1} parent=1 // pred_fallthru
      _
    %1377 = vsyncpa [#allocation3], 1
    %1378 = vsyncpa [#allocation6], 1
    %1379 = vsyncpa [#allocation4], 1

</llo_original>
